<compile_context>
chip_gen: v7x
topology: tpu7x:2x2x1
jax: 0.10.0
libtpu: 0.0.40
codegen_flags: <defaults>
</compile_context>

<pallas_src>
from functools import partial

import numpy as np
import jax
import jax.numpy as jnp
from jax import lax
from jax.experimental import pallas as pl
from jax.experimental.pallas import tpu as pltpu

# ----------------------------- hyper-parameters -----------------------------
NODE_HEIGHT = 4      # conv in_channels
NODE_WIDTH = 16      # conv width
CONV_OUT = 8         # conv out_channels
KERNEL_SIZE = 3      # (1, K) kernel, odd -> 'same' width
CNN_OUT = 16         # cnn_out_channels
GAT1 = 16            # gat1_out_channels
GAT2 = 16            # gat2_out_channels
EDGE_HIDDEN = 32     # Edge_hidden_dim
EDGE_IN = 4          # edge_in_channels
NUM_HEADS = 1
NEG_SLOPE_GAT = 0.2  # GATv2 leaky-relu slope
NEG_SLOPE_CNN = 0.01 # nn.LeakyReLU default

_W2 = NODE_WIDTH // 2
_CW = NODE_HEIGHT * NODE_WIDTH        # 64   flattened (channel, width) input per node
_POOLED = CONV_OUT * _W2              # 64   flattened pooled conv output (oc, w2) order

VMEM = pl.BlockSpec(memory_space=pltpu.MemorySpace.VMEM)

# TODO(synk): the fused GATv2 layer implements heads == 1 (the module default);
# a multi-head concat path is not implemented.
assert NUM_HEADS == 1

# --------------------- misc-weight slab row offsets (8-aligned) ---------------------
_R_FC = 0                         # [64, 32]  fc_e | fc_p
_R_LR1 = _R_FC + _POOLED          # [19, 32]  lin_l1 | lin_r1   (padded to 24 rows)
_R_LR2 = _R_LR1 + 24              # [16, 32]  lin_l2 | lin_r2
_R_EDGE = _R_LR2 + GAT1           # [ 4, 64]  lin_edge1 | lin_edge2 | wc1_edge (padded to 8)
_R_ATT1 = _R_EDGE + 8             # [16,  1]  att1 (column)
_R_ATT2 = _R_ATT1 + GAT1          # [16,  1]  att2 (column)
_R_WC1N = _R_ATT2 + GAT2          # [16, 64]  wc1_src | wc1_dst
_R_WC2 = _R_WC1N + GAT2           # [ 1, 32]  wc2^T (row)         (padded to 8)
_MISC_ROWS = _R_WC2 + 8           # 168

# ------------------------------- bias slab rows --------------------------------
(_B_CONV_E, _B_CONV_P, _B_FC, _B_LR1, _B_LR2,
 _B_OUT1, _B_OUT2, _B_C1, _B_C2) = range(9)
_BIAS_ROWS = 16


# ----------------------- constant im2col/pool selectors ----------------------
def _pool_selector(parity):
    """T[w_in, w2, k] = 1 iff input col w_in feeds conv tap k at output col 2*w2+parity."""
    pad = (KERNEL_SIZE - 1) // 2
    t = np.zeros((NODE_WIDTH, _W2, KERNEL_SIZE), np.float32)
    for w2 in range(_W2):
        for k in range(KERNEL_SIZE):
            w_in = 2 * w2 + parity + k - pad
            if 0 <= w_in < NODE_WIDTH:
                t[w_in, w2, k] = 1.0
    return jnp.asarray(t)


_T_EVEN = _pool_selector(0)
_T_ODD = _pool_selector(1)


# ------------------------------- fused kernel --------------------------------
def _fused_kernel(ne, n_nodes, n_edges, n_ep,
                  xcomb_ref, extras_ref, srcc_ref, tgtc_ref, tgtr_ref, ea_ref,
                  wconv_ref, wm_ref, b_ref, out_ref):
    f32 = jnp.float32

    # ------- CNN branches: conv(1,K)+LeakyReLU+MaxPool(1,2)+Flatten+Linear -------
    # One block-diagonal [N,128]x[128,128] matmul covers both branches and both
    # pooling parities (even cols 0:64, odd cols 64:128).
    row = lax.broadcasted_iota(jnp.int32, (n_nodes, 1), 0)
    is_e = row < ne                                                   # e-nodes first
    y = jnp.dot(xcomb_ref[...], wconv_ref[...], preferred_element_type=f32)   # [N,128]
    y = y + jnp.where(is_e, b_ref[_B_CONV_E:_B_CONV_E + 1, :],
                      b_ref[_B_CONV_P:_B_CONV_P + 1, :])              # per-branch conv bias
    y = jnp.where(y > 0, y, NEG_SLOPE_CNN * y)                        # LeakyReLU
    pooled = jnp.maximum(y[:, 0:_POOLED], y[:, _POOLED:2 * _POOLED])  # MaxPool2d((1,2))
    f = jnp.dot(pooled, wm_ref[_R_FC:_R_FC + _POOLED, 0:2 * CNN_OUT],
                preferred_element_type=f32)                           # fc_e | fc_p fused
    f = f + b_ref[_B_FC:_B_FC + 1, 0:2 * CNN_OUT]
    cnn_out = jnp.where(is_e, f[:, 0:CNN_OUT], f[:, CNN_OUT:2 * CNN_OUT])  # [N,16]
    extras = extras_ref[...]                                          # [N,3] one-hot type + degree

    # ---------- exact one-hot gather/scatter matrices from int32 indices ----------
    lane_n = lax.broadcasted_iota(jnp.int32, (n_ep, n_nodes), 1)
    src_mask = srcc_ref[...] == lane_n                                # [E', N] bool
    tgt_mask = tgtc_ref[...] == lane_n                                # [E', N] bool
    a_src_t = src_mask.astype(f32)                                    # gather at src
    a_tgt_t = tgt_mask.astype(f32)                                    # gather at tgt
    row_n = lax.broadcasted_iota(jnp.int32, (n_nodes, n_ep), 0)
    a_tgt = (tgtr_ref[...] == row_n).astype(f32)                      # [N, E'] scatter to tgt
    ea_full = ea_ref[...]                                             # [E', EDGE_IN] incl. loop attrs

    def elu(v):
        # exp only evaluated on the clamped (<=0) branch -> no overflow work
        return jnp.where(v > 0, v, jnp.exp(jnp.minimum(v, 0.0)) - 1.0)

    def gatv2_layer(xlr, ee, att_col, bias_row, c):
        """Single-head GATv2 propagate; segment softmax with no O(E'^2) work."""
        xl = xlr[:, 0:c]
        xr = xlr[:, c:2 * c]
        xl_src = jnp.dot(a_src_t, xl, preferred_element_type=f32)     # x_j = lin_l(x)[src]  [E', c]
        xr_dst = jnp.dot(a_tgt_t, xr, preferred_element_type=f32)     # x_i = lin_r(x)[dst]  [E', c]
        s = xl_src + xr_dst + ee
        s = jnp.where(s > 0, s, NEG_SLOPE_GAT * s)                    # leaky_relu
        logit = jnp.dot(s, att_col, preferred_element_type=f32)       # [E', 1]
        # per-target segment softmax (every node has a self-loop => denom >= 1)
        masked_t = jnp.where(tgt_mask, logit, -1e30)                  # [E', N]
        m_node = jnp.max(masked_t, axis=0, keepdims=True)             # segment max    [1, N]
        p_t = jnp.where(tgt_mask, jnp.exp(masked_t - m_node), 0.0)    # [E', N]
        denom = jnp.sum(p_t, axis=0, keepdims=True)                   # segment sum    [1, N]
        # gather segment max / denom back per edge (exact one-hot lane reductions)
        m_edge = jnp.sum(a_tgt_t * m_node, axis=1, keepdims=True)     # m[tgt[e]]      [E', 1]
        d_edge = jnp.sum(a_tgt_t * denom, axis=1, keepdims=True)      # denom[tgt[e]]  [E', 1]
        alpha = jnp.exp(logit - m_edge) * pl.reciprocal(d_edge, approx=True)
        out = jnp.dot(a_tgt, xl_src * alpha, preferred_element_type=f32)   # sum_j alpha * x_j
        return out + bias_row

    # Edge-attr projections for both GAT layers and the classifier, fused into one dot.
    ee_all = jnp.dot(ea_full, wm_ref[_R_EDGE:_R_EDGE + EDGE_IN, 0:2 * GAT1 + EDGE_HIDDEN],
                     preferred_element_type=f32)                      # [E', 64]

    # ------------------------------ GATv2 layer 1 ------------------------------
    xlr1 = (jnp.dot(cnn_out, wm_ref[_R_LR1:_R_LR1 + CNN_OUT, 0:2 * GAT1],
                    preferred_element_type=f32)
            + jnp.dot(extras, wm_ref[_R_LR1 + CNN_OUT:_R_LR1 + CNN_OUT + 3, 0:2 * GAT1],
                      preferred_element_type=f32)
            + b_ref[_B_LR1:_B_LR1 + 1, 0:2 * GAT1])                   # lin_l | lin_r fused
    h1 = gatv2_layer(xlr1, ee_all[:, 0:GAT1],
                     wm_ref[_R_ATT1:_R_ATT1 + GAT1, 0:1],
                     b_ref[_B_OUT1:_B_OUT1 + 1, 0:GAT1], GAT1)
    h1 = elu(h1)                                                      # F.elu between layers

    # ------------------------------ GATv2 layer 2 ------------------------------
    xlr2 = (jnp.dot(h1, wm_ref[_R_LR2:_R_LR2 + GAT1, 0:2 * GAT2],
                    preferred_element_type=f32)
            + b_ref[_B_LR2:_B_LR2 + 1, 0:2 * GAT2])
    h2 = gatv2_layer(xlr2, ee_all[:, GAT1:2 * GAT1],
                     wm_ref[_R_ATT2:_R_ATT2 + GAT2, 0:1],
                     b_ref[_B_OUT2:_B_OUT2 + 1, 0:GAT2], GAT2)

    # ----------------------------- edge classifier -----------------------------
    # Attention MLP of EdgeAttentionClassifier ends in softmax over a size-1 axis,
    # which is identically 1.0 -> weighted_features == combined_features (exact).
    # Project h2 through the src|dst blocks of the classifier first (one dot),
    # then gather per-edge (two one-hot dots).
    hp = jnp.dot(h2, wm_ref[_R_WC1N:_R_WC1N + GAT2, 0:2 * EDGE_HIDDEN],
                 preferred_element_type=f32)                          # [N, 64]
    hid = (jnp.dot(a_src_t[0:n_edges, :], hp[:, 0:EDGE_HIDDEN], preferred_element_type=f32)
           + jnp.dot(a_tgt_t[0:n_edges, :], hp[:, EDGE_HIDDEN:2 * EDGE_HIDDEN],
                     preferred_element_type=f32)
           + ee_all[0:n_edges, 2 * GAT1:2 * GAT1 + EDGE_HIDDEN]
           + b_ref[_B_C1:_B_C1 + 1, 0:EDGE_HIDDEN])
    hid = elu(hid)
    # Final layer emitted lane-major ([1, E]) via an A @ B^T matmul (dense store).
    out_ref[...] = (lax.dot_general(wm_ref[_R_WC2:_R_WC2 + 1, 0:EDGE_HIDDEN], hid,
                                    dimension_numbers=(((1,), (1,)), ((), ())),
                                    preferred_element_type=f32)
                    + b_ref[_B_C2:_B_C2 + 1, 0:1])


# ---------------------------- parameter preparation ---------------------------
def prepare_params(params):
    """One-time preprocessing: composite conv weights + packed weight/bias slabs."""
    def conv_composite(cw):  # cw: [OC, C, K] (torch layout, height dim squeezed)
        wev = jnp.einsum("ock,wvk->cwov", cw, _T_EVEN).reshape(_CW, _POOLED)
        wod = jnp.einsum("ock,wvk->cwov", cw, _T_ODD).reshape(_CW, _POOLED)
        return np.asarray(wev, np.float32), np.asarray(wod, np.float32)

    ce, cp = params["cnn_e"], params["cnn_p"]
    wev_e, wod_e = conv_composite(ce["conv_w"])
    wev_p, wod_p = conv_composite(cp["conv_w"])
    # [2*C*W, 2*OC*W/2] = [128, 128]: rows = e|p branch blocks, cols = even|odd pooling taps
    w_conv = np.concatenate(
        [np.concatenate([wev_e, wev_p], axis=0),
         np.concatenate([wod_e, wod_p], axis=0)], axis=1)

    g = params["gat"]
    c1, c2, ec = g["conv1"], g["conv2"], g["ec"]
    A = lambda x: np.asarray(x, np.float32)

    # ----------------------------- misc weight slab -----------------------------
    wm = np.zeros((_MISC_ROWS, 128), np.float32)

    def put(r, a):
        wm[r:r + a.shape[0], :a.shape[1]] = a

    put(_R_FC, np.concatenate([A(ce["fc_w"]), A(cp["fc_w"])], axis=1))           # [64, 32]
    put(_R_LR1, np.concatenate([A(c1["wl"]), A(c1["wr"])], axis=1))              # [19, 32]
    put(_R_LR2, np.concatenate([A(c2["wl"]), A(c2["wr"])], axis=1))              # [16, 32]
    put(_R_EDGE, np.concatenate([A(c1["we"]), A(c2["we"]),
                                 A(ec["wc1"])[2 * GAT2:, :]], axis=1))           # [ 4, 64]
    put(_R_ATT1, A(c1["att"]).T)                                                 # [16,  1]
    put(_R_ATT2, A(c2["att"]).T)                                                 # [16,  1]
    put(_R_WC1N, np.concatenate([A(ec["wc1"])[:GAT2, :],
                                 A(ec["wc1"])[GAT2:2 * GAT2, :]], axis=1))       # [16, 64]
    put(_R_WC2, A(ec["wc2"]).T)                                                  # [ 1, 32]

    # -------------------------------- bias slab ---------------------------------
    bs = np.zeros((_BIAS_ROWS, 128), np.float32)
    cbe = np.repeat(A(ce["conv_b"]), _W2)            # conv bias broadcast over (oc, w2)
    cbp = np.repeat(A(cp["conv_b"]), _W2)
    bs[_B_CONV_E, :] = np.concatenate([cbe, cbe])    # same bias for even & odd halves
    bs[_B_CONV_P, :] = np.concatenate([cbp, cbp])
    bs[_B_FC, :2 * CNN_OUT] = np.concatenate([A(ce["fc_b"]), A(cp["fc_b"])])
    bs[_B_LR1, :2 * GAT1] = np.concatenate([A(c1["bl"]), A(c1["br"])])
    bs[_B_LR2, :2 * GAT2] = np.concatenate([A(c2["bl"]), A(c2["br"])])
    bs[_B_OUT1, :GAT1] = A(c1["bias"])
    bs[_B_OUT2, :GAT2] = A(c2["bias"])
    bs[_B_C1, :EDGE_HIDDEN] = A(ec["bc1"])
    bs[_B_C2, 0] = float(ec["bc2"][0])

    # wa*/ba* (attention MLP) are omitted: softmax over the size-1 output axis is
    # identically 1.0 and does not affect the forward output.
    return {"w_conv": jnp.asarray(w_conv), "w_misc": jnp.asarray(wm),
            "bias": jnp.asarray(bs)}


# --------------------------------- forward ------------------------------------
def dual_cnn_gatv2_forward(prep, x_e, x_p, node_degree, edge_index, edge_attr):
    f32 = jnp.float32
    ne, npn = x_e.shape[0], x_p.shape[0]
    n_nodes = ne + npn
    n_edges = edge_index.shape[1]
    n_ep = n_edges + n_nodes                               # edges + self-loops

    # Tiny data-dependent glue (per call): flatten CNN inputs into a block-diagonal
    # slab, build node extras, and append self-loops (fill_value='mean' edge attrs).
    xe_flat = x_e.reshape(ne, _CW).astype(f32)
    xp_flat = x_p.reshape(npn, _CW).astype(f32)
    xcomb = jnp.zeros((n_nodes, 2 * _CW), f32)
    xcomb = xcomb.at[:ne, :_CW].set(xe_flat)
    xcomb = xcomb.at[ne:, _CW:].set(xp_flat)

    idx = jnp.arange(n_nodes)
    extras = jnp.concatenate(
        [(idx < ne).astype(f32)[:, None], (idx >= ne).astype(f32)[:, None],
         node_degree.astype(f32)], axis=1)                 # [N, 3] one_hot_encode + degree

    tgt0 = edge_index[1]
    counts = jax.ops.segment_sum(jnp.ones((n_edges,), f32), tgt0, num_segments=n_nodes)
    sums = jax.ops.segment_sum(edge_attr.astype(f32), tgt0, num_segments=n_nodes)
    loop_attr = sums / jnp.maximum(counts, 1.0)[:, None]   # scatter-mean (0 if no in-edges)
    ea_full = jnp.concatenate([edge_attr.astype(f32), loop_attr], axis=0)   # [E', EDGE_IN]
    ar = jnp.arange(n_nodes, dtype=jnp.int32)
    src_full = jnp.concatenate([edge_index[0].astype(jnp.int32), ar])
    tgt_full = jnp.concatenate([edge_index[1].astype(jnp.int32), ar])

    kernel = partial(_fused_kernel, ne, n_nodes, n_edges, n_ep)
    out = pl.pallas_call(
        kernel,
        out_shape=jax.ShapeDtypeStruct((1, n_edges), f32),   # lane-major output
        in_specs=[VMEM] * 9,
        out_specs=VMEM,
    )(xcomb, extras, src_full[:, None], tgt_full[:, None], tgt_full[None, :], ea_full,
      prep["w_conv"], prep["w_misc"], prep["bias"])
    return out[0]                                          # .squeeze()


# ------------------------------ parameter init --------------------------------
def _dense_init(key, shape, scale=0.1):
    return (scale * jax.random.normal(key, shape)).astype(jnp.float32)


def init_params(key):
    keys = iter(jax.random.split(key, 40))
    nk = lambda: next(keys)
    fc_in = CONV_OUT * (NODE_WIDTH // 2)

    def cnn_params():
        return {"conv_w": _dense_init(nk(), (CONV_OUT, NODE_HEIGHT, KERNEL_SIZE)),
                "conv_b": _dense_init(nk(), (CONV_OUT,)),
                "fc_w": _dense_init(nk(), (fc_in, CNN_OUT)),      # row order (oc, w2) = torch flatten
                "fc_b": _dense_init(nk(), (CNN_OUT,))}

    def gat_conv_params(in_ch, out_ch, heads, concat):
        hc = heads * out_ch
        return {"wl": _dense_init(nk(), (in_ch, hc)), "bl": _dense_init(nk(), (hc,)),
                "wr": _dense_init(nk(), (in_ch, hc)), "br": _dense_init(nk(), (hc,)),
                "we": _dense_init(nk(), (EDGE_IN, hc)),
                "att": _dense_init(nk(), (heads, out_ch)),
                "bias": _dense_init(nk(), (hc if concat else out_ch,))}

    node_in = CNN_OUT + 3
    d = 2 * GAT2 + EDGE_IN
    return {
        "cnn_e": cnn_params(),
        "cnn_p": cnn_params(),
        "gat": {
            "conv1": gat_conv_params(node_in, GAT1, NUM_HEADS, True),
            "conv2": gat_conv_params(GAT1 * NUM_HEADS, GAT2, 1, False),
            "ec": {
                # wa*/ba* are the attention MLP; its size-1 softmax is identically 1,
                # so they have no effect on the forward output (kept for structural parity).
                "wa1": _dense_init(nk(), (d, 64)), "ba1": _dense_init(nk(), (64,)),
                "wa2": _dense_init(nk(), (64, 1)), "ba2": _dense_init(nk(), (1,)),
                "wc1": _dense_init(nk(), (d, EDGE_HIDDEN)), "bc1": _dense_init(nk(), (EDGE_HIDDEN,)),
                "wc2": _dense_init(nk(), (EDGE_HIDDEN, 1)), "bc2": _dense_init(nk(), (1,))},
        },
    }


# ----------------------------------- main --------------------------------------
if __name__ == "__main__":
    key = jax.random.PRNGKey(0)
    kp, k1, k2, k3, k4, k5, k6 = jax.random.split(key, 7)

    params = init_params(kp)
    prep = prepare_params(params)          # one-time weight packing (outside jit)

    n_e, n_p = 5, 6
    n_nodes = n_e + n_p
    n_edges = 20

    x_e = jax.random.normal(k1, (n_e, NODE_HEIGHT, NODE_WIDTH), jnp.float32)
    x_p = jax.random.normal(k2, (n_p, NODE_HEIGHT, NODE_WIDTH), jnp.float32)
    node_degree = jax.random.uniform(k3, (n_nodes, 1), jnp.float32)
    src = jax.random.randint(k4, (n_edges,), 0, n_nodes)
    off = jax.random.randint(k5, (n_edges,), 1, n_nodes)
    dst = (src + off) % n_nodes                                # no self-loops in input
    edge_index = jnp.stack([src, dst]).astype(jnp.int32)       # [2, E]
    edge_attr = jax.random.normal(k6, (n_edges, EDGE_IN), jnp.float32)

    fwd = jax.jit(dual_cnn_gatv2_forward)
    out = fwd(prep, x_e, x_p, node_degree, edge_index, edge_attr)
    out = jax.block_until_ready(out)
    assert out.shape == (n_edges,)
    assert not bool(jnp.any(jnp.isnan(out)))
    print("KERNEL_OK")
</pallas_src>

<mosaic_0001>
module attributes {stable_mosaic.version = 11 : i64} {
  func.func @_fused_kernel(%arg0: memref<11x128xf32, #tpu.memory_space<vmem>>, %arg1: memref<11x3xf32, #tpu.memory_space<vmem>>, %arg2: memref<31x1xi32, #tpu.memory_space<vmem>>, %arg3: memref<31x1xi32, #tpu.memory_space<vmem>>, %arg4: memref<1x31xi32, #tpu.memory_space<vmem>>, %arg5: memref<31x4xf32, #tpu.memory_space<vmem>>, %arg6: memref<128x128xf32, #tpu.memory_space<vmem>>, %arg7: memref<168x128xf32, #tpu.memory_space<vmem>>, %arg8: memref<16x128xf32, #tpu.memory_space<vmem>>, %arg9: memref<1x20xf32, #tpu.memory_space<vmem>>) attributes {dimension_semantics = [], scalar_prefetch = 0 : i64, scratch_operands = 0 : i64, tpu.core_type = #tpu.core_type<tc>} {
    %0 = tpu.iota {dimensions = array<i32: 0>} : vector<11x1xi32>
    %c5_i32 = arith.constant 5 : i32
    %1 = vector.broadcast %c5_i32 : i32 to vector<11x1xi32>
    %2 = arith.cmpi slt, %0, %1 : vector<11x1xi32>
    %c0 = arith.constant 0 : index
    %c0_0 = arith.constant 0 : index
    %3 = vector.load %arg0[%c0, %c0_0] : memref<11x128xf32, #tpu.memory_space<vmem>>, vector<11x128xf32>
    %c0_1 = arith.constant 0 : index
    %c0_2 = arith.constant 0 : index
    %4 = vector.load %arg6[%c0_1, %c0_2] : memref<128x128xf32, #tpu.memory_space<vmem>>, vector<128x128xf32>
    %cst = arith.constant dense<0.000000e+00> : vector<11x128xf32>
    %5 = tpu.matmul %3, %4, %cst {dimension_numbers = #tpu.dot_dimension_numbers<[1], [0], [0], [1], [0, 0, 1, 1], [], []>} : vector<11x128xf32>, vector<128x128xf32>, vector<11x128xf32> -> vector<11x128xf32>
    %c0_3 = arith.constant 0 : index
    %c0_4 = arith.constant 0 : index
    %6 = vector.load %arg8[%c0_3, %c0_4] : memref<16x128xf32, #tpu.memory_space<vmem>>, vector<1x128xf32>
    %c1 = arith.constant 1 : index
    %c0_5 = arith.constant 0 : index
    %7 = vector.load %arg8[%c1, %c0_5] : memref<16x128xf32, #tpu.memory_space<vmem>>, vector<1x128xf32>
    %8 = vector.shape_cast %2 : vector<11x1xi1> to vector<11x1xi1>
    %9 = vector.broadcast %8 : vector<11x1xi1> to vector<11x128xi1>
    %10 = vector.shape_cast %6 : vector<1x128xf32> to vector<1x128xf32>
    %11 = vector.broadcast %10 : vector<1x128xf32> to vector<11x128xf32>
    %12 = vector.shape_cast %7 : vector<1x128xf32> to vector<1x128xf32>
    %13 = vector.broadcast %12 : vector<1x128xf32> to vector<11x128xf32>
    %14 = arith.select %9, %11, %13 : vector<11x128xi1>, vector<11x128xf32>
    %15 = arith.addf %5, %14 : vector<11x128xf32>
    %cst_6 = arith.constant 0.000000e+00 : f32
    %16 = vector.broadcast %cst_6 : f32 to vector<11x128xf32>
    %17 = arith.cmpf ogt, %15, %16 : vector<11x128xf32>
    %cst_7 = arith.constant 0.00999999977 : f32
    %18 = vector.broadcast %cst_7 : f32 to vector<11x128xf32>
    %19 = arith.mulf %18, %15 : vector<11x128xf32>
    %20 = arith.select %17, %15, %19 : vector<11x128xi1>, vector<11x128xf32>
    %21 = vector.extract_strided_slice %20 {offsets = [0, 0], sizes = [11, 64], strides = [1, 1]} : vector<11x128xf32> to vector<11x64xf32>
    %22 = vector.extract_strided_slice %20 {offsets = [0, 64], sizes = [11, 64], strides = [1, 1]} : vector<11x128xf32> to vector<11x64xf32>
    %23 = arith.maximumf %21, %22 : vector<11x64xf32>
    %c0_8 = arith.constant 0 : index
    %c0_9 = arith.constant 0 : index
    %24 = vector.load %arg7[%c0_8, %c0_9] : memref<168x128xf32, #tpu.memory_space<vmem>>, vector<64x32xf32>
    %cst_10 = arith.constant dense<0.000000e+00> : vector<11x32xf32>
    %25 = tpu.matmul %23, %24, %cst_10 {dimension_numbers = #tpu.dot_dimension_numbers<[1], [0], [0], [1], [0, 0, 1, 1], [], []>} : vector<11x64xf32>, vector<64x32xf32>, vector<11x32xf32> -> vector<11x32xf32>
    %c2 = arith.constant 2 : index
    %c0_11 = arith.constant 0 : index
    %26 = vector.load %arg8[%c2, %c0_11] : memref<16x128xf32, #tpu.memory_space<vmem>>, vector<1x32xf32>
    %27 = vector.broadcast %26 : vector<1x32xf32> to vector<11x32xf32>
    %28 = arith.addf %25, %27 : vector<11x32xf32>
    %29 = vector.extract_strided_slice %28 {offsets = [0, 0], sizes = [11, 16], strides = [1, 1]} : vector<11x32xf32> to vector<11x16xf32>
    %30 = vector.extract_strided_slice %28 {offsets = [0, 16], sizes = [11, 16], strides = [1, 1]} : vector<11x32xf32> to vector<11x16xf32>
    %31 = vector.shape_cast %2 : vector<11x1xi1> to vector<11x1xi1>
    %32 = vector.broadcast %31 : vector<11x1xi1> to vector<11x16xi1>
    %33 = arith.select %32, %29, %30 : vector<11x16xi1>, vector<11x16xf32>
    %c0_12 = arith.constant 0 : index
    %c0_13 = arith.constant 0 : index
    %34 = vector.load %arg1[%c0_12, %c0_13] : memref<11x3xf32, #tpu.memory_space<vmem>>, vector<11x3xf32>
    %35 = tpu.iota {dimensions = array<i32: 1>} : vector<31x11xi32>
    %c0_14 = arith.constant 0 : index
    %c0_15 = arith.constant 0 : index
    %36 = vector.load %arg2[%c0_14, %c0_15] : memref<31x1xi32, #tpu.memory_space<vmem>>, vector<31x1xi32>
    %37 = vector.broadcast %36 : vector<31x1xi32> to vector<31x11xi32>
    %38 = arith.cmpi eq, %37, %35 : vector<31x11xi32>
    %c0_16 = arith.constant 0 : index
    %c0_17 = arith.constant 0 : index
    %39 = vector.load %arg3[%c0_16, %c0_17] : memref<31x1xi32, #tpu.memory_space<vmem>>, vector<31x1xi32>
    %40 = vector.broadcast %39 : vector<31x1xi32> to vector<31x11xi32>
    %41 = arith.cmpi eq, %40, %35 : vector<31x11xi32>
    %42 = arith.extui %38 : vector<31x11xi1> to vector<31x11xi32>
    %43 = arith.sitofp %42 : vector<31x11xi32> to vector<31x11xf32>
    %44 = arith.extui %41 : vector<31x11xi1> to vector<31x11xi32>
    %45 = arith.sitofp %44 : vector<31x11xi32> to vector<31x11xf32>
    %46 = tpu.iota {dimensions = array<i32: 0>} : vector<11x31xi32>
    %c0_18 = arith.constant 0 : index
    %c0_19 = arith.constant 0 : index
    %47 = vector.load %arg4[%c0_18, %c0_19] : memref<1x31xi32, #tpu.memory_space<vmem>>, vector<1x31xi32>
    %48 = vector.broadcast %47 : vector<1x31xi32> to vector<11x31xi32>
    %49 = arith.cmpi eq, %48, %46 : vector<11x31xi32>
    %50 = arith.extui %49 : vector<11x31xi1> to vector<11x31xi32>
    %51 = arith.sitofp %50 : vector<11x31xi32> to vector<11x31xf32>
    %c0_20 = arith.constant 0 : index
    %c0_21 = arith.constant 0 : index
    %52 = vector.load %arg5[%c0_20, %c0_21] : memref<31x4xf32, #tpu.memory_space<vmem>>, vector<31x4xf32>
    %c104 = arith.constant 104 : index
    %c0_22 = arith.constant 0 : index
    %53 = vector.load %arg7[%c104, %c0_22] : memref<168x128xf32, #tpu.memory_space<vmem>>, vector<4x64xf32>
    %cst_23 = arith.constant dense<0.000000e+00> : vector<31x64xf32>
    %54 = tpu.matmul %52, %53, %cst_23 {dimension_numbers = #tpu.dot_dimension_numbers<[1], [0], [0], [1], [0, 0, 1, 1], [], []>} : vector<31x4xf32>, vector<4x64xf32>, vector<31x64xf32> -> vector<31x64xf32>
    %c64 = arith.constant 64 : index
    %c0_24 = arith.constant 0 : index
    %55 = vector.load %arg7[%c64, %c0_24] : memref<168x128xf32, #tpu.memory_space<vmem>>, vector<16x32xf32>
    %cst_25 = arith.constant dense<0.000000e+00> : vector<11x32xf32>
    %56 = tpu.matmul %33, %55, %cst_25 {dimension_numbers = #tpu.dot_dimension_numbers<[1], [0], [0], [1], [0, 0, 1, 1], [], []>} : vector<11x16xf32>, vector<16x32xf32>, vector<11x32xf32> -> vector<11x32xf32>
    %c80 = arith.constant 80 : index
    %c0_26 = arith.constant 0 : index
    %57 = vector.load %arg7[%c80, %c0_26] : memref<168x128xf32, #tpu.memory_space<vmem>>, vector<3x32xf32>
    %cst_27 = arith.constant dense<0.000000e+00> : vector<11x32xf32>
    %58 = tpu.matmul %34, %57, %cst_27 {dimension_numbers = #tpu.dot_dimension_numbers<[1], [0], [0], [1], [0, 0, 1, 1], [], []>} : vector<11x3xf32>, vector<3x32xf32>, vector<11x32xf32> -> vector<11x32xf32>
    %59 = arith.addf %56, %58 : vector<11x32xf32>
    %c3 = arith.constant 3 : index
    %c0_28 = arith.constant 0 : index
    %60 = vector.load %arg8[%c3, %c0_28] : memref<16x128xf32, #tpu.memory_space<vmem>>, vector<1x32xf32>
    %61 = vector.broadcast %60 : vector<1x32xf32> to vector<11x32xf32>
    %62 = arith.addf %59, %61 : vector<11x32xf32>
    %63 = vector.extract_strided_slice %54 {offsets = [0, 0], sizes = [31, 16], strides = [1, 1]} : vector<31x64xf32> to vector<31x16xf32>
    %c112 = arith.constant 112 : index
    %c0_29 = arith.constant 0 : index
    %64 = vector.load %arg7[%c112, %c0_29] : memref<168x128xf32, #tpu.memory_space<vmem>>, vector<16x1xf32>
    %c5 = arith.constant 5 : index
    %c0_30 = arith.constant 0 : index
    %65 = vector.load %arg8[%c5, %c0_30] : memref<16x128xf32, #tpu.memory_space<vmem>>, vector<1x16xf32>
    %66 = vector.extract_strided_slice %62 {offsets = [0, 0], sizes = [11, 16], strides = [1, 1]} : vector<11x32xf32> to vector<11x16xf32>
    %67 = vector.extract_strided_slice %62 {offsets = [0, 16], sizes = [11, 16], strides = [1, 1]} : vector<11x32xf32> to vector<11x16xf32>
    %cst_31 = arith.constant dense<0.000000e+00> : vector<31x16xf32>
    %68 = tpu.matmul %43, %66, %cst_31 {dimension_numbers = #tpu.dot_dimension_numbers<[1], [0], [0], [1], [0, 0, 1, 1], [], []>} : vector<31x11xf32>, vector<11x16xf32>, vector<31x16xf32> -> vector<31x16xf32>
    %cst_32 = arith.constant dense<0.000000e+00> : vector<31x16xf32>
    %69 = tpu.matmul %45, %67, %cst_32 {dimension_numbers = #tpu.dot_dimension_numbers<[1], [0], [0], [1], [0, 0, 1, 1], [], []>} : vector<31x11xf32>, vector<11x16xf32>, vector<31x16xf32> -> vector<31x16xf32>
    %70 = arith.addf %68, %69 : vector<31x16xf32>
    %71 = arith.addf %70, %63 : vector<31x16xf32>
    %cst_33 = arith.constant 0.000000e+00 : f32
    %72 = vector.broadcast %cst_33 : f32 to vector<31x16xf32>
    %73 = arith.cmpf ogt, %71, %72 : vector<31x16xf32>
    %cst_34 = arith.constant 2.000000e-01 : f32
    %74 = vector.broadcast %cst_34 : f32 to vector<31x16xf32>
    %75 = arith.mulf %74, %71 : vector<31x16xf32>
    %76 = arith.select %73, %71, %75 : vector<31x16xi1>, vector<31x16xf32>
    %cst_35 = arith.constant dense<0.000000e+00> : vector<31x1xf32>
    %77 = tpu.matmul %76, %64, %cst_35 {dimension_numbers = #tpu.dot_dimension_numbers<[1], [0], [0], [1], [0, 0, 1, 1], [], []>} : vector<31x16xf32>, vector<16x1xf32>, vector<31x1xf32> -> vector<31x1xf32>
    %cst_36 = arith.constant -1.000000e+30 : f32
    %78 = vector.shape_cast %77 : vector<31x1xf32> to vector<31x1xf32>
    %79 = vector.broadcast %78 : vector<31x1xf32> to vector<31x11xf32>
    %80 = vector.broadcast %cst_36 : f32 to vector<31x11xf32>
    %81 = arith.select %41, %79, %80 : vector<31x11xi1>, vector<31x11xf32>
    %cst_37 = arith.constant dense<0xFF800000> : vector<11xf32>
    %82 = vector.multi_reduction <maximumf>, %81, %cst_37 [0] : vector<31x11xf32> to vector<11xf32>
    %83 = vector.shape_cast %82 : vector<11xf32> to vector<1x11xf32>
    %84 = vector.broadcast %83 : vector<1x11xf32> to vector<31x11xf32>
    %85 = arith.subf %81, %84 : vector<31x11xf32>
    %86 = math.exp %85 : vector<31x11xf32>
    %cst_38 = arith.constant 0.000000e+00 : f32
    %87 = vector.broadcast %cst_38 : f32 to vector<31x11xf32>
    %88 = arith.select %41, %86, %87 : vector<31x11xi1>, vector<31x11xf32>
    %cst_39 = arith.constant dense<0.000000e+00> : vector<11xf32>
    %89 = vector.multi_reduction <add>, %88, %cst_39 [0] : vector<31x11xf32> to vector<11xf32>
    %90 = vector.shape_cast %89 : vector<11xf32> to vector<1x11xf32>
    %91 = vector.broadcast %83 : vector<1x11xf32> to vector<31x11xf32>
    %92 = arith.mulf %45, %91 : vector<31x11xf32>
    %cst_40 = arith.constant dense<0.000000e+00> : vector<31xf32>
    %93 = vector.multi_reduction <add>, %92, %cst_40 [1] : vector<31x11xf32> to vector<31xf32>
    %94 = vector.shape_cast %93 : vector<31xf32> to vector<31x1xf32>
    %95 = vector.broadcast %90 : vector<1x11xf32> to vector<31x11xf32>
    %96 = arith.mulf %45, %95 : vector<31x11xf32>
    %cst_41 = arith.constant dense<0.000000e+00> : vector<31xf32>
    %97 = vector.multi_reduction <add>, %96, %cst_41 [1] : vector<31x11xf32> to vector<31xf32>
    %98 = vector.shape_cast %97 : vector<31xf32> to vector<31x1xf32>
    %99 = arith.subf %77, %94 : vector<31x1xf32>
    %100 = math.exp %99 : vector<31x1xf32>
    %101 = tpu.reciprocal %98 {approx = true} : vector<31x1xf32> -> vector<31x1xf32>
    %102 = arith.mulf %100, %101 : vector<31x1xf32>
    %103 = vector.broadcast %102 : vector<31x1xf32> to vector<31x16xf32>
    %104 = arith.mulf %68, %103 : vector<31x16xf32>
    %cst_42 = arith.constant dense<0.000000e+00> : vector<11x16xf32>
    %105 = tpu.matmul %51, %104, %cst_42 {dimension_numbers = #tpu.dot_dimension_numbers<[1], [0], [0], [1], [0, 0, 1, 1], [], []>} : vector<11x31xf32>, vector<31x16xf32>, vector<11x16xf32> -> vector<11x16xf32>
    %106 = vector.broadcast %65 : vector<1x16xf32> to vector<11x16xf32>
    %107 = arith.addf %105, %106 : vector<11x16xf32>
    %cst_43 = arith.constant 0.000000e+00 : f32
    %108 = vector.broadcast %cst_43 : f32 to vector<11x16xf32>
    %109 = arith.cmpf ogt, %107, %108 : vector<11x16xf32>
    %cst_44 = arith.constant 0.000000e+00 : f32
    %110 = vector.broadcast %cst_44 : f32 to vector<11x16xf32>
    %111 = arith.minimumf %107, %110 : vector<11x16xf32>
    %112 = math.exp %111 : vector<11x16xf32>
    %cst_45 = arith.constant 1.000000e+00 : f32
    %113 = vector.broadcast %cst_45 : f32 to vector<11x16xf32>
    %114 = arith.subf %112, %113 : vector<11x16xf32>
    %115 = arith.select %109, %107, %114 : vector<11x16xi1>, vector<11x16xf32>
    %c88 = arith.constant 88 : index
    %c0_46 = arith.constant 0 : index
    %116 = vector.load %arg7[%c88, %c0_46] : memref<168x128xf32, #tpu.memory_space<vmem>>, vector<16x32xf32>
    %cst_47 = arith.constant dense<0.000000e+00> : vector<11x32xf32>
    %117 = tpu.matmul %115, %116, %cst_47 {dimension_numbers = #tpu.dot_dimension_numbers<[1], [0], [0], [1], [0, 0, 1, 1], [], []>} : vector<11x16xf32>, vector<16x32xf32>, vector<11x32xf32> -> vector<11x32xf32>
    %c4 = arith.constant 4 : index
    %c0_48 = arith.constant 0 : index
    %118 = vector.load %arg8[%c4, %c0_48] : memref<16x128xf32, #tpu.memory_space<vmem>>, vector<1x32xf32>
    %119 = vector.broadcast %118 : vector<1x32xf32> to vector<11x32xf32>
    %120 = arith.addf %117, %119 : vector<11x32xf32>
    %121 = vector.extract_strided_slice %54 {offsets = [0, 16], sizes = [31, 16], strides = [1, 1]} : vector<31x64xf32> to vector<31x16xf32>
    %c128 = arith.constant 128 : index
    %c0_49 = arith.constant 0 : index
    %122 = vector.load %arg7[%c128, %c0_49] : memref<168x128xf32, #tpu.memory_space<vmem>>, vector<16x1xf32>
    %c6 = arith.constant 6 : index
    %c0_50 = arith.constant 0 : index
    %123 = vector.load %arg8[%c6, %c0_50] : memref<16x128xf32, #tpu.memory_space<vmem>>, vector<1x16xf32>
    %124 = vector.extract_strided_slice %120 {offsets = [0, 0], sizes = [11, 16], strides = [1, 1]} : vector<11x32xf32> to vector<11x16xf32>
    %125 = vector.extract_strided_slice %120 {offsets = [0, 16], sizes = [11, 16], strides = [1, 1]} : vector<11x32xf32> to vector<11x16xf32>
    %cst_51 = arith.constant dense<0.000000e+00> : vector<31x16xf32>
    %126 = tpu.matmul %43, %124, %cst_51 {dimension_numbers = #tpu.dot_dimension_numbers<[1], [0], [0], [1], [0, 0, 1, 1], [], []>} : vector<31x11xf32>, vector<11x16xf32>, vector<31x16xf32> -> vector<31x16xf32>
    %cst_52 = arith.constant dense<0.000000e+00> : vector<31x16xf32>
    %127 = tpu.matmul %45, %125, %cst_52 {dimension_numbers = #tpu.dot_dimension_numbers<[1], [0], [0], [1], [0, 0, 1, 1], [], []>} : vector<31x11xf32>, vector<11x16xf32>, vector<31x16xf32> -> vector<31x16xf32>
    %128 = arith.addf %126, %127 : vector<31x16xf32>
    %129 = arith.addf %128, %121 : vector<31x16xf32>
    %cst_53 = arith.constant 0.000000e+00 : f32
    %130 = vector.broadcast %cst_53 : f32 to vector<31x16xf32>
    %131 = arith.cmpf ogt, %129, %130 : vector<31x16xf32>
    %cst_54 = arith.constant 2.000000e-01 : f32
    %132 = vector.broadcast %cst_54 : f32 to vector<31x16xf32>
    %133 = arith.mulf %132, %129 : vector<31x16xf32>
    %134 = arith.select %131, %129, %133 : vector<31x16xi1>, vector<31x16xf32>
    %cst_55 = arith.constant dense<0.000000e+00> : vector<31x1xf32>
    %135 = tpu.matmul %134, %122, %cst_55 {dimension_numbers = #tpu.dot_dimension_numbers<[1], [0], [0], [1], [0, 0, 1, 1], [], []>} : vector<31x16xf32>, vector<16x1xf32>, vector<31x1xf32> -> vector<31x1xf32>
    %cst_56 = arith.constant -1.000000e+30 : f32
    %136 = vector.shape_cast %135 : vector<31x1xf32> to vector<31x1xf32>
    %137 = vector.broadcast %136 : vector<31x1xf32> to vector<31x11xf32>
    %138 = vector.broadcast %cst_56 : f32 to vector<31x11xf32>
    %139 = arith.select %41, %137, %138 : vector<31x11xi1>, vector<31x11xf32>
    %cst_57 = arith.constant dense<0xFF800000> : vector<11xf32>
    %140 = vector.multi_reduction <maximumf>, %139, %cst_57 [0] : vector<31x11xf32> to vector<11xf32>
    %141 = vector.shape_cast %140 : vector<11xf32> to vector<1x11xf32>
    %142 = vector.broadcast %141 : vector<1x11xf32> to vector<31x11xf32>
    %143 = arith.subf %139, %142 : vector<31x11xf32>
    %144 = math.exp %143 : vector<31x11xf32>
    %cst_58 = arith.constant 0.000000e+00 : f32
    %145 = vector.broadcast %cst_58 : f32 to vector<31x11xf32>
    %146 = arith.select %41, %144, %145 : vector<31x11xi1>, vector<31x11xf32>
    %cst_59 = arith.constant dense<0.000000e+00> : vector<11xf32>
    %147 = vector.multi_reduction <add>, %146, %cst_59 [0] : vector<31x11xf32> to vector<11xf32>
    %148 = vector.shape_cast %147 : vector<11xf32> to vector<1x11xf32>
    %149 = vector.broadcast %141 : vector<1x11xf32> to vector<31x11xf32>
    %150 = arith.mulf %45, %149 : vector<31x11xf32>
    %cst_60 = arith.constant dense<0.000000e+00> : vector<31xf32>
    %151 = vector.multi_reduction <add>, %150, %cst_60 [1] : vector<31x11xf32> to vector<31xf32>
    %152 = vector.shape_cast %151 : vector<31xf32> to vector<31x1xf32>
    %153 = vector.broadcast %148 : vector<1x11xf32> to vector<31x11xf32>
    %154 = arith.mulf %45, %153 : vector<31x11xf32>
    %cst_61 = arith.constant dense<0.000000e+00> : vector<31xf32>
    %155 = vector.multi_reduction <add>, %154, %cst_61 [1] : vector<31x11xf32> to vector<31xf32>
    %156 = vector.shape_cast %155 : vector<31xf32> to vector<31x1xf32>
    %157 = arith.subf %135, %152 : vector<31x1xf32>
    %158 = math.exp %157 : vector<31x1xf32>
    %159 = tpu.reciprocal %156 {approx = true} : vector<31x1xf32> -> vector<31x1xf32>
    %160 = arith.mulf %158, %159 : vector<31x1xf32>
    %161 = vector.broadcast %160 : vector<31x1xf32> to vector<31x16xf32>
    %162 = arith.mulf %126, %161 : vector<31x16xf32>
    %cst_62 = arith.constant dense<0.000000e+00> : vector<11x16xf32>
    %163 = tpu.matmul %51, %162, %cst_62 {dimension_numbers = #tpu.dot_dimension_numbers<[1], [0], [0], [1], [0, 0, 1, 1], [], []>} : vector<11x31xf32>, vector<31x16xf32>, vector<11x16xf32> -> vector<11x16xf32>
    %164 = vector.broadcast %123 : vector<1x16xf32> to vector<11x16xf32>
    %165 = arith.addf %163, %164 : vector<11x16xf32>
    %c144 = arith.constant 144 : index
    %c0_63 = arith.constant 0 : index
    %166 = vector.load %arg7[%c144, %c0_63] : memref<168x128xf32, #tpu.memory_space<vmem>>, vector<16x64xf32>
    %cst_64 = arith.constant dense<0.000000e+00> : vector<11x64xf32>
    %167 = tpu.matmul %165, %166, %cst_64 {dimension_numbers = #tpu.dot_dimension_numbers<[1], [0], [0], [1], [0, 0, 1, 1], [], []>} : vector<11x16xf32>, vector<16x64xf32>, vector<11x64xf32> -> vector<11x64xf32>
    %168 = vector.extract_strided_slice %43 {offsets = [0, 0], sizes = [20, 11], strides = [1, 1]} : vector<31x11xf32> to vector<20x11xf32>
    %169 = vector.extract_strided_slice %167 {offsets = [0, 0], sizes = [11, 32], strides = [1, 1]} : vector<11x64xf32> to vector<11x32xf32>
    %cst_65 = arith.constant dense<0.000000e+00> : vector<20x32xf32>
    %170 = tpu.matmul %168, %169, %cst_65 {dimension_numbers = #tpu.dot_dimension_numbers<[1], [0], [0], [1], [0, 0, 1, 1], [], []>} : vector<20x11xf32>, vector<11x32xf32>, vector<20x32xf32> -> vector<20x32xf32>
    %171 = vector.extract_strided_slice %45 {offsets = [0, 0], sizes = [20, 11], strides = [1, 1]} : vector<31x11xf32> to vector<20x11xf32>
    %172 = vector.extract_strided_slice %167 {offsets = [0, 32], sizes = [11, 32], strides = [1, 1]} : vector<11x64xf32> to vector<11x32xf32>
    %cst_66 = arith.constant dense<0.000000e+00> : vector<20x32xf32>
    %173 = tpu.matmul %171, %172, %cst_66 {dimension_numbers = #tpu.dot_dimension_numbers<[1], [0], [0], [1], [0, 0, 1, 1], [], []>} : vector<20x11xf32>, vector<11x32xf32>, vector<20x32xf32> -> vector<20x32xf32>
    %174 = arith.addf %170, %173 : vector<20x32xf32>
    %175 = vector.extract_strided_slice %54 {offsets = [0, 32], sizes = [20, 32], strides = [1, 1]} : vector<31x64xf32> to vector<20x32xf32>
    %176 = arith.addf %174, %175 : vector<20x32xf32>
    %c7 = arith.constant 7 : index
    %c0_67 = arith.constant 0 : index
    %177 = vector.load %arg8[%c7, %c0_67] : memref<16x128xf32, #tpu.memory_space<vmem>>, vector<1x32xf32>
    %178 = vector.broadcast %177 : vector<1x32xf32> to vector<20x32xf32>
    %179 = arith.addf %176, %178 : vector<20x32xf32>
    %cst_68 = arith.constant 0.000000e+00 : f32
    %180 = vector.broadcast %cst_68 : f32 to vector<20x32xf32>
    %181 = arith.cmpf ogt, %179, %180 : vector<20x32xf32>
    %cst_69 = arith.constant 0.000000e+00 : f32
    %182 = vector.broadcast %cst_69 : f32 to vector<20x32xf32>
    %183 = arith.minimumf %179, %182 : vector<20x32xf32>
    %184 = math.exp %183 : vector<20x32xf32>
    %cst_70 = arith.constant 1.000000e+00 : f32
    %185 = vector.broadcast %cst_70 : f32 to vector<20x32xf32>
    %186 = arith.subf %184, %185 : vector<20x32xf32>
    %187 = arith.select %181, %179, %186 : vector<20x32xi1>, vector<20x32xf32>
    %c160 = arith.constant 160 : index
    %c0_71 = arith.constant 0 : index
    %188 = vector.load %arg7[%c160, %c0_71] : memref<168x128xf32, #tpu.memory_space<vmem>>, vector<1x32xf32>
    %cst_72 = arith.constant dense<0.000000e+00> : vector<1x20xf32>
    %189 = tpu.matmul %188, %187, %cst_72 {dimension_numbers = #tpu.dot_dimension_numbers<[1], [1], [0], [0], [0, 0, 1, 0], [], []>} : vector<1x32xf32>, vector<20x32xf32>, vector<1x20xf32> -> vector<1x20xf32>
    %c8 = arith.constant 8 : index
    %c0_73 = arith.constant 0 : index
    %190 = vector.load %arg8[%c8, %c0_73] : memref<16x128xf32, #tpu.memory_space<vmem>>, vector<1x1xf32>
    %191 = vector.broadcast %190 : vector<1x1xf32> to vector<1x20xf32>
    %192 = arith.addf %189, %191 : vector<1x20xf32>
    %c0_74 = arith.constant 0 : index
    %c0_75 = arith.constant 0 : index
    %193 = vector.load %arg9[%c0_74, %c0_75] : memref<1x20xf32, #tpu.memory_space<vmem>>, vector<1x20xf32>
    tpu.vector_store %arg9[%c0_74, %c0_75], %192 {strides = array<i32>} : memref<1x20xf32, #tpu.memory_space<vmem>>, vector<1x20xf32>,
    return
  }
}

</mosaic_0001>

<llo_original>
// kernel: dual_cnn_gatv2_forward.1
$region0: #{dual_cnn_gatv2_forward.1}
  #allocation0 [shape = 'u32[]', space=smem, size = 0x4, offset = 0x4, fixed_abs, tag = 'smem constant byte address 0x4 - core index']
  #allocation1 [shape = 'u32[144,128]{1,0:T(1,128)}', space=vmem, size = 0x12000, scoped, tag = 'internal scratch']
  %s0 = inlined_call_operand.vmem [shape: f32[11,128], index: 0, kind: input, shape index: {}]
  %s1 = inlined_call_operand.vmem [shape: f32[11,3], index: 1, kind: input, shape index: {}]
  %s2 = inlined_call_operand.vmem [shape: s32[31,1], index: 2, kind: input, shape index: {}]
  %s3 = inlined_call_operand.vmem [shape: s32[31,1], index: 3, kind: input, shape index: {}]
  %s4 = inlined_call_operand.vmem [shape: s32[1,31], index: 4, kind: input, shape index: {}]
  %s5 = inlined_call_operand.vmem [shape: f32[31,4], index: 5, kind: input, shape index: {}]
  %s6 = inlined_call_operand.vmem [shape: f32[128,128], index: 6, kind: input, shape index: {}]
  %s7 = inlined_call_operand.vmem [shape: f32[168,128], index: 7, kind: input, shape index: {}]
  %s8 = inlined_call_operand.vmem [shape: f32[16,128], index: 8, kind: input, shape index: {}]
  %s9 = inlined_call_operand.hbm [shape: f32[1,20], index: 9, kind: output, shape index: {}]
  %s10 = sld [smem:[#allocation0]]
  $region46: #{dual_cnn_gatv2_forward.1} parent=0
    _
  %s12 = ssub.s32 1, %s10
  %s13 = scalar_select 0, %s12, %s10
  $region1: #{dual_cnn_gatv2_forward.1} parent=0
    #allocation2 [shape = 'u8[512]{0}', space=vmem, size = 0x400, scoped, tag = 'output window, operand 0, single buffered']
    #allocation3 [shape = 's32[1]{0}', space=sflag, size = 0x4, scoped, tag = 'scoped memory for dual_cnn_gatv2_forward.1']
    %14 = vsyncpa [#allocation3], 0
    // Predicated region
    $region2: #{dual_cnn_gatv2_forward.1} parent=1 // pred_check
      _
    $region3: #{dual_cnn_gatv2_forward.1} parent=1 // pred_check_branch
      %16 = sbr.rel (0) target = $region5
    $region4: #{dual_cnn_gatv2_forward.1} parent=1 // pred_region
      _
    $region5: #{dual_cnn_gatv2_forward.1} parent=1 // pred_fallthru
      _
    // Predicated region
    $region6: #{dual_cnn_gatv2_forward.1} parent=1 // pred_check
      _
    $region7: #{dual_cnn_gatv2_forward.1} parent=1 // pred_check_branch
      %18 = sbr.rel (0) target = $region9
    $region8: #{dual_cnn_gatv2_forward.1} parent=1 // pred_region
      _
    $region9: #{dual_cnn_gatv2_forward.1} parent=1 // pred_fallthru
      _
    // Predicated region
    $region10: #{dual_cnn_gatv2_forward.1} parent=1 // pred_check
      _
    $region11: #{dual_cnn_gatv2_forward.1} parent=1 // pred_check_branch
      %20 = sbr.rel (0) target = $region13
    $region12: #{dual_cnn_gatv2_forward.1} parent=1 // pred_region
      _
    $region13: #{dual_cnn_gatv2_forward.1} parent=1 // pred_fallthru
      _
    // Predicated region
    $region14: #{dual_cnn_gatv2_forward.1} parent=1 // pred_check
      _
    $region15: #{dual_cnn_gatv2_forward.1} parent=1 // pred_check_branch
      %22 = sbr.rel (0) target = $region17
    $region16: #{dual_cnn_gatv2_forward.1} parent=1 // pred_region
      _
    $region17: #{dual_cnn_gatv2_forward.1} parent=1 // pred_fallthru
      _
    // Predicated region
    $region18: #{dual_cnn_gatv2_forward.1} parent=1 // pred_check
      _
    $region19: #{dual_cnn_gatv2_forward.1} parent=1 // pred_check_branch
      %24 = sbr.rel (0) target = $region21
    $region20: #{dual_cnn_gatv2_forward.1} parent=1 // pred_region
      _
    $region21: #{dual_cnn_gatv2_forward.1} parent=1 // pred_fallthru
      _
    // Predicated region
    $region22: #{dual_cnn_gatv2_forward.1} parent=1 // pred_check
      _
    $region23: #{dual_cnn_gatv2_forward.1} parent=1 // pred_check_branch
      %26 = sbr.rel (0) target = $region25
    $region24: #{dual_cnn_gatv2_forward.1} parent=1 // pred_region
      _
    $region25: #{dual_cnn_gatv2_forward.1} parent=1 // pred_fallthru
      _
    // Predicated region
    $region26: #{dual_cnn_gatv2_forward.1} parent=1 // pred_check
      _
    $region27: #{dual_cnn_gatv2_forward.1} parent=1 // pred_check_branch
      %28 = sbr.rel (0) target = $region29
    $region28: #{dual_cnn_gatv2_forward.1} parent=1 // pred_region
      _
    $region29: #{dual_cnn_gatv2_forward.1} parent=1 // pred_fallthru
      _
    // Predicated region
    $region30: #{dual_cnn_gatv2_forward.1} parent=1 // pred_check
      _
    $region31: #{dual_cnn_gatv2_forward.1} parent=1 // pred_check_branch
      %30 = sbr.rel (0) target = $region33
    $region32: #{dual_cnn_gatv2_forward.1} parent=1 // pred_region
      _
    $region33: #{dual_cnn_gatv2_forward.1} parent=1 // pred_fallthru
      _
    // Predicated region
    $region34: #{dual_cnn_gatv2_forward.1} parent=1 // pred_check
      _
    $region35: #{dual_cnn_gatv2_forward.1} parent=1 // pred_check_branch
      %32 = sbr.rel (0) target = $region37
    $region36: #{dual_cnn_gatv2_forward.1} parent=1 // pred_region
      _
    $region37: #{dual_cnn_gatv2_forward.1} parent=1 // pred_fallthru
      _
    %v33 = vlaneseq
    %v34 = vshrl.u32 %v33, 7
    %v35 = vadd.s32 %v34, 8
    %vm36 = vcmp.lt.s32.totalorder %v34, 5
    %vm37 = vcmp.lt.s32.totalorder %v35, 5
    %v38 = vld [vmem:[%s0] sm:$0xff]
    %v39 = vld [vmem:[%s0 + $0x8] sm:$0x7]
    %v40 = vld [vmem:[%s6] sm:$0xff]
    %v41 = vld [vmem:[%s6 + $0x8] sm:$0xff]
    %v42 = vld [vmem:[%s6 + $0x10] sm:$0xff]
    %v43 = vld [vmem:[%s6 + $0x18] sm:$0xff]
    %v44 = vld [vmem:[%s6 + $0x20] sm:$0xff]
    %v45 = vld [vmem:[%s6 + $0x28] sm:$0xff]
    %v46 = vld [vmem:[%s6 + $0x30] sm:$0xff]
    %v47 = vld [vmem:[%s6 + $0x38] sm:$0xff]
    %v48 = vld [vmem:[%s6 + $0x40] sm:$0xff]
    %v49 = vld [vmem:[%s6 + $0x48] sm:$0xff]
    %v50 = vld [vmem:[%s6 + $0x50] sm:$0xff]
    %v51 = vld [vmem:[%s6 + $0x58] sm:$0xff]
    %v52 = vld [vmem:[%s6 + $0x60] sm:$0xff]
    %v53 = vld [vmem:[%s6 + $0x68] sm:$0xff]
    %v54 = vld [vmem:[%s6 + $0x70] sm:$0xff]
    %v55 = vld [vmem:[%s6 + $0x78] sm:$0xff]
    %v56 = vld [vmem:[%s8] sm:$0x1]
    %v57 = vld [vmem:[%s8 + $0x1] sm:$0x1]
    %v58 = vsel %vm36, 1, 0
    %v59 = vsel %vm37, 1, 0
    %vm60 = vcmp.eq.s32.totalorder %v58, 1
    %vm61 = vcmp.eq.s32.totalorder %v59, 1
    %v62 = vlaneseq
    %v63 = vshrl.u32 %v62, 7
    %v64 = vsub.s32 0, %v63
    %v65 = vrot.slane %v56, %v64
    %v66 = vlaneseq
    %v67 = vshrl.u32 %v66, 7
    %v68 = vsub.s32 0, %v67
    %v69 = vrot.slane %v57, %v68
    %v70 = vsel %vm60, %v65, %v69
    %v71 = vsel %vm61, %v65, %v69
    %72 = vmatprep.subr.mxu0 0.0
    %73 = vmatpush1.msra.mxu0 %v40
    %74 = vmatprep.subr.mxu0 0.0
    %75 = vmatpush1.msra.mxu0 %v41
    %76 = vmatprep.subr.mxu0 0.0
    %77 = vmatpush1.msra.mxu0 %v42
    %78 = vmatprep.subr.mxu0 0.0
    %79 = vmatpush1.msra.mxu0 %v43
    %80 = vmatprep.subr.mxu0 0.0
    %81 = vmatpush1.msra.mxu0 %v44
    %82 = vmatprep.subr.mxu0 0.0
    %83 = vmatpush1.msra.mxu0 %v45
    %84 = vmatprep.subr.mxu0 0.0
    %85 = vmatpush1.msra.mxu0 %v46
    %86 = vmatprep.subr.mxu0 0.0
    %87 = vmatpush1.msra.mxu0 %v47
    %88 = vmatprep.subr.mxu0 0.0
    %89 = vmatpush1.msra.mxu0 %v48
    %90 = vmatprep.subr.mxu0 0.0
    %91 = vmatpush1.msra.mxu0 %v49
    %92 = vmatprep.subr.mxu0 0.0
    %93 = vmatpush1.msra.mxu0 %v50
    %94 = vmatprep.subr.mxu0 0.0
    %95 = vmatpush1.msra.mxu0 %v51
    %96 = vmatprep.subr.mxu0 0.0
    %97 = vmatpush1.msra.mxu0 %v52
    %98 = vmatprep.subr.mxu0 0.0
    %99 = vmatpush1.msra.mxu0 %v53
    %100 = vmatprep.subr.mxu0 0.0
    %101 = vmatpush1.msra.mxu0 %v54
    %102 = vmatprep.subr.mxu0 0.0
    %103 = vmatpush1.msra.mxu0 %v55
    %104 = vmatprep.subr.mxu0 0.0
    %105 = vmatpush1.msra.mxu0 0.0
    %106 = vmatprep.subr.mxu0 0.0
    %107 = vmatpush1.msra.mxu0 0.0
    %108 = vmatprep.subr.mxu0 0.0
    %109 = vmatpush1.msra.mxu0 0.0
    %110 = vmatprep.subr.mxu0 0.0
    %111 = vmatpush1.msra.mxu0 0.0
    %112 = vmatprep.subr.mxu0 0.0
    %113 = vmatpush1.msra.mxu0 0.0
    %114 = vmatprep.subr.mxu0 0.0
    %115 = vmatpush1.msra.mxu0 0.0
    %116 = vmatprep.subr.mxu0 0.0
    %117 = vmatpush1.msra.mxu0 0.0
    %118 = vmatprep.subr.mxu0 0.0
    %119 = vmatpush1.msra.mxu0 0.0
    %120 = vmatprep.subr.mxu0 0.0
    %121 = vmatpush1.msra.mxu0 0.0
    %122 = vmatprep.subr.mxu0 0.0
    %123 = vmatpush1.msra.mxu0 0.0
    %124 = vmatprep.subr.mxu0 0.0
    %125 = vmatpush1.msra.mxu0 0.0
    %126 = vmatprep.subr.mxu0 0.0
    %127 = vmatpush1.msra.mxu0 0.0
    %128 = vmatprep.subr.mxu0 0.0
    %129 = vmatpush1.msra.mxu0 0.0
    %130 = vmatprep.subr.mxu0 0.0
    %131 = vmatpush1.msra.mxu0 0.0
    %132 = vmatprep.subr.mxu0 0.0
    %133 = vmatpush1.msra.mxu0 0.0
    %134 = vmatprep.subr.mxu0 0.0
    %135 = vmatpush1.msra.mxu0 0.0
    %136 = vmatprep.mubr.f32.mxu0 0.0
    %137 = vmatmul.mubr.f32.gmra.mrb[0].mxu0 %v38
    %v138 = vpop.f32.mrb[0].mxu0
    %v139 = vadd.f32 %v70, %v138
    %v140 = vpop.f32.mrb[0].mxu0
    %141 = vmatprep.mubr.f32.mxu0 0.0
    %142 = vmatmul.mubr.f32.gmra.mrb[0].mxu0 %v39
    %v143 = vpop.f32.mrb[0].mxu0
    %v144 = vadd.f32 %v71, %v143
    %v145 = vpop.f32.mrb[0].mxu0
    %146 = vdwg.mxu0
    %vm147 = vcmp.gt.f32.partialorder %v139, 0.0
    %vm148 = vcmp.gt.f32.partialorder %v144, 0.0
    %v149 = vmul.f32 %v139, 0.01
    %v150 = vmul.f32 %v144, 0.01
    %v151 = vsel %vm147, %v139, %v149
    %v152 = vsel %vm148, %v144, %v150
    %155 = vrot.lane.b32.xlu0 %v151, 64
    %v156 = vpop.permute.xlu0 %155
    %157 = vrot.lane.b32.xlu0 %v152, 64
    %v158 = vpop.permute.xlu0 %157
    %v161 = vmax.f32 %v151, %v156
    %v162 = vmax.f32 %v152, %v158
    %v163 = vld [vmem:[%s7] sm:$0xff]
    %v164 = vld [vmem:[%s7 + $0x8] sm:$0xff]
    %v165 = vld [vmem:[%s7 + $0x10] sm:$0xff]
    %v166 = vld [vmem:[%s7 + $0x18] sm:$0xff]
    %v167 = vld [vmem:[%s7 + $0x20] sm:$0xff]
    %v168 = vld [vmem:[%s7 + $0x28] sm:$0xff]
    %v169 = vld [vmem:[%s7 + $0x30] sm:$0xff]
    %v170 = vld [vmem:[%s7 + $0x38] sm:$0xff]
    %v171 = vld [vmem:[%s8 + $0x2] sm:$0x1]
    %v172 = vlaneseq
    %v173 = vshrl.u32 %v172, 7
    %v174 = vsub.s32 0, %v173
    %v175 = vrot.slane %v171, %v174
    %vm176 = vcmask 523264
    %v178 = vsel %vm176, %v161, 0
    %v181 = vsel %vm176, %v162, 0
    %183 = vmatprep.subr.mxu0 0.0
    %184 = vmatpush1.msra.mxu0 %v163
    %185 = vmatprep.subr.mxu0 0.0
    %186 = vmatpush1.msra.mxu0 %v164
    %187 = vmatprep.subr.mxu0 0.0
    %188 = vmatpush1.msra.mxu0 %v165
    %189 = vmatprep.subr.mxu0 0.0
    %190 = vmatpush1.msra.mxu0 %v166
    %191 = vmatprep.subr.mxu0 0.0
    %192 = vmatpush1.msra.mxu0 %v167
    %193 = vmatprep.subr.mxu0 0.0
    %194 = vmatpush1.msra.mxu0 %v168
    %195 = vmatprep.subr.mxu0 0.0
    %196 = vmatpush1.msra.mxu0 %v169
    %197 = vmatprep.subr.mxu0 0.0
    %198 = vmatpush1.msra.mxu0 %v170
    %199 = vmatprep.subr.mxu0 0.0
    %200 = vmatpush1.msra.mxu0 0.0
    %201 = vmatprep.subr.mxu0 0.0
    %202 = vmatpush1.msra.mxu0 0.0
    %203 = vmatprep.subr.mxu0 0.0
    %204 = vmatpush1.msra.mxu0 0.0
    %205 = vmatprep.subr.mxu0 0.0
    %206 = vmatpush1.msra.mxu0 0.0
    %207 = vmatprep.subr.mxu0 0.0
    %208 = vmatpush1.msra.mxu0 0.0
    %209 = vmatprep.subr.mxu0 0.0
    %210 = vmatpush1.msra.mxu0 0.0
    %211 = vmatprep.subr.mxu0 0.0
    %212 = vmatpush1.msra.mxu0 0.0
    %213 = vmatprep.subr.mxu0 0.0
    %214 = vmatpush1.msra.mxu0 0.0
    %215 = vmatprep.subr.mxu0 0.0
    %216 = vmatpush1.msra.mxu0 0.0
    %217 = vmatprep.subr.mxu0 0.0
    %218 = vmatpush1.msra.mxu0 0.0
    %219 = vmatprep.subr.mxu0 0.0
    %220 = vmatpush1.msra.mxu0 0.0
    %221 = vmatprep.subr.mxu0 0.0
    %222 = vmatpush1.msra.mxu0 0.0
    %223 = vmatprep.subr.mxu0 0.0
    %224 = vmatpush1.msra.mxu0 0.0
    %225 = vmatprep.subr.mxu0 0.0
    %226 = vmatpush1.msra.mxu0 0.0
    %227 = vmatprep.subr.mxu0 0.0
    %228 = vmatpush1.msra.mxu0 0.0
    %229 = vmatprep.subr.mxu0 0.0
    %230 = vmatpush1.msra.mxu0 0.0
    %231 = vmatprep.subr.mxu0 0.0
    %232 = vmatpush1.msra.mxu0 0.0
    %233 = vmatprep.subr.mxu0 0.0
    %234 = vmatpush1.msra.mxu0 0.0
    %235 = vmatprep.subr.mxu0 0.0
    %236 = vmatpush1.msra.mxu0 0.0
    %237 = vmatprep.subr.mxu0 0.0
    %238 = vmatpush1.msra.mxu0 0.0
    %239 = vmatprep.subr.mxu0 0.0
    %240 = vmatpush1.msra.mxu0 0.0
    %241 = vmatprep.subr.mxu0 0.0
    %242 = vmatpush1.msra.mxu0 0.0
    %243 = vmatprep.subr.mxu0 0.0
    %244 = vmatpush1.msra.mxu0 0.0
    %245 = vmatprep.subr.mxu0 0.0
    %246 = vmatpush1.msra.mxu0 0.0
    %247 = vmatprep.mubr.f32.mxu0 0.0
    %248 = vmatmul.mubr.f32.gmra.mrb[0].mxu0 %v178
    %v249 = vpop.f32.mrb[0].mxu0
    %v250 = vadd.f32 %v175, %v249
    %v251 = vpop.f32.mrb[0].mxu0
    %252 = vmatprep.mubr.f32.mxu0 0.0
    %253 = vmatmul.mubr.f32.gmra.mrb[0].mxu0 %v181
    %v254 = vpop.f32.mrb[0].mxu0
    %v255 = vadd.f32 %v175, %v254
    %v256 = vpop.f32.mrb[0].mxu0
    %257 = vdwg.mxu0
    %260 = vrot.lane.b32.xlu0 %v250, 112
    %v261 = vpop.permute.xlu0 %260
    %262 = vrot.lane.b32.xlu0 %v255, 112
    %v263 = vpop.permute.xlu0 %262
    %v266 = vsel %vm60, %v250, %v261
    %v267 = vsel %vm61, %v255, %v263
    %v268 = vld [vmem:[%s1] sm:$0xff]
    %v269 = vld [vmem:[%s1 + $0x8] sm:$0x7]
    %v270 = vlaneseq
    %v271 = vand.u32 %v270, 127
    %v272 = vld [vmem:[%s2] sm:$0xff]
    %v273 = vld [vmem:[%s2 + $0x8] sm:$0xff]
    %v274 = vld [vmem:[%s2 + $0x10] sm:$0xff]
    %v275 = vld [vmem:[%s2 + $0x18] sm:$0x7f]
    %276 = vset.pattern.permute.xlu0 0
    %277 = vperm.xlu0 %276, %v272
    %v278 = vpop.permute.xlu0 %277
    %279 = vset.pattern.permute.xlu0 0
    %280 = vperm.xlu0 %279, %v273
    %v281 = vpop.permute.xlu0 %280
    %282 = vset.pattern.permute.xlu0 0
    %283 = vperm.xlu0 %282, %v274
    %v284 = vpop.permute.xlu0 %283
    %285 = vset.pattern.permute.xlu0 0
    %286 = vperm.xlu0 %285, %v275
    %v287 = vpop.permute.xlu0 %286
    %vm288 = vcmp.eq.s32.totalorder %v278, %v271
    %vm289 = vcmp.eq.s32.totalorder %v281, %v271
    %vm290 = vcmp.eq.s32.totalorder %v284, %v271
    %vm291 = vcmp.eq.s32.totalorder %v287, %v271
    %v292 = vld [vmem:[%s3] sm:$0xff]
    %v293 = vld [vmem:[%s3 + $0x8] sm:$0xff]
    %v294 = vld [vmem:[%s3 + $0x10] sm:$0xff]
    %v295 = vld [vmem:[%s3 + $0x18] sm:$0x7f]
    %296 = vset.pattern.permute.xlu0 0
    %297 = vperm.xlu0 %296, %v292
    %v298 = vpop.permute.xlu0 %297
    %299 = vset.pattern.permute.xlu0 0
    %300 = vperm.xlu0 %299, %v293
    %v301 = vpop.permute.xlu0 %300
    %302 = vset.pattern.permute.xlu0 0
    %303 = vperm.xlu0 %302, %v294
    %v304 = vpop.permute.xlu0 %303
    %305 = vset.pattern.permute.xlu0 0
    %306 = vperm.xlu0 %305, %v295
    %v307 = vpop.permute.xlu0 %306
    %vm308 = vcmp.eq.s32.totalorder %v298, %v271
    %vm309 = vcmp.eq.s32.totalorder %v301, %v271
    %vm310 = vcmp.eq.s32.totalorder %v304, %v271
    %vm311 = vcmp.eq.s32.totalorder %v307, %v271
    %v312 = vsel %vm288, 1, 0
    %v313 = vsel %vm289, 1, 0
    %v314 = vsel %vm290, 1, 0
    %v315 = vsel %vm291, 1, 0
    %v316 = vcvt.s32.f32 %v312
    %v317 = vcvt.s32.f32 %v313
    %v318 = vcvt.s32.f32 %v314
    %v319 = vcvt.s32.f32 %v315
    %v320 = vsel %vm308, 1, 0
    %v321 = vsel %vm309, 1, 0
    %v322 = vsel %vm310, 1, 0
    %v323 = vsel %vm311, 1, 0
    %v324 = vcvt.s32.f32 %v320
    %v325 = vcvt.s32.f32 %v321
    %v326 = vcvt.s32.f32 %v322
    %v327 = vcvt.s32.f32 %v323
    %v328 = vld [vmem:[%s4] sm:$0x1]
    %v329 = vlaneseq
    %v330 = vshrl.u32 %v329, 7
    %v331 = vsub.s32 0, %v330
    %v332 = vrot.slane %v328, %v331
    %vm333 = vcmp.eq.s32.totalorder %v332, %v34
    %vm334 = vcmp.eq.s32.totalorder %v332, %v35
    %v335 = vsel %vm333, 1, 0
    %v336 = vsel %vm334, 1, 0
    %v337 = vcvt.s32.f32 %v335
    %v338 = vcvt.s32.f32 %v336
    %v339 = vld [vmem:[%s5] sm:$0xff]
    %v340 = vld [vmem:[%s5 + $0x8] sm:$0xff]
    %v341 = vld [vmem:[%s5 + $0x10] sm:$0xff]
    %v342 = vld [vmem:[%s5 + $0x18] sm:$0x7f]
    %v343 = vld [vmem:[%s7 + $0x68] sm:$0xf]
    %vm344 = vcmask 31744
    %v346 = vsel %vm344, %v339, 0
    %v349 = vsel %vm344, %v340, 0
    %v352 = vsel %vm344, %v341, 0
    %v355 = vsel %vm344, %v342, 0
    %vm357 = vcmask 1043456
    %v359 = vsel %vm357, %v343, 0
    %361 = vmatprep.subr.mxu0 0.0
    %362 = vmatpush1.msra.mxu0 %v359
    %363 = vmatprep.subr.mxu0 0.0
    %364 = vmatpush1.msra.mxu0 0.0
    %365 = vmatprep.subr.mxu0 0.0
    %366 = vmatpush1.msra.mxu0 0.0
    %367 = vmatprep.subr.mxu0 0.0
    %368 = vmatpush1.msra.mxu0 0.0
    %369 = vmatprep.subr.mxu0 0.0
    %370 = vmatpush1.msra.mxu0 0.0
    %371 = vmatprep.subr.mxu0 0.0
    %372 = vmatpush1.msra.mxu0 0.0
    %373 = vmatprep.subr.mxu0 0.0
    %374 = vmatpush1.msra.mxu0 0.0
    %375 = vmatprep.subr.mxu0 0.0
    %376 = vmatpush1.msra.mxu0 0.0
    %377 = vmatprep.subr.mxu0 0.0
    %378 = vmatpush1.msra.mxu0 0.0
    %379 = vmatprep.subr.mxu0 0.0
    %380 = vmatpush1.msra.mxu0 0.0
    %381 = vmatprep.subr.mxu0 0.0
    %382 = vmatpush1.msra.mxu0 0.0
    %383 = vmatprep.subr.mxu0 0.0
    %384 = vmatpush1.msra.mxu0 0.0
    %385 = vmatprep.subr.mxu0 0.0
    %386 = vmatpush1.msra.mxu0 0.0
    %387 = vmatprep.subr.mxu0 0.0
    %388 = vmatpush1.msra.mxu0 0.0
    %389 = vmatprep.subr.mxu0 0.0
    %390 = vmatpush1.msra.mxu0 0.0
    %391 = vmatprep.subr.mxu0 0.0
    %392 = vmatpush1.msra.mxu0 0.0
    %393 = vmatprep.subr.mxu0 0.0
    %394 = vmatpush1.msra.mxu0 0.0
    %395 = vmatprep.subr.mxu0 0.0
    %396 = vmatpush1.msra.mxu0 0.0
    %397 = vmatprep.subr.mxu0 0.0
    %398 = vmatpush1.msra.mxu0 0.0
    %399 = vmatprep.subr.mxu0 0.0
    %400 = vmatpush1.msra.mxu0 0.0
    %401 = vmatprep.subr.mxu0 0.0
    %402 = vmatpush1.msra.mxu0 0.0
    %403 = vmatprep.subr.mxu0 0.0
    %404 = vmatpush1.msra.mxu0 0.0
    %405 = vmatprep.subr.mxu0 0.0
    %406 = vmatpush1.msra.mxu0 0.0
    %407 = vmatprep.subr.mxu0 0.0
    %408 = vmatpush1.msra.mxu0 0.0
    %409 = vmatprep.subr.mxu0 0.0
    %410 = vmatpush1.msra.mxu0 0.0
    %411 = vmatprep.subr.mxu0 0.0
    %412 = vmatpush1.msra.mxu0 0.0
    %413 = vmatprep.subr.mxu0 0.0
    %414 = vmatpush1.msra.mxu0 0.0
    %415 = vmatprep.subr.mxu0 0.0
    %416 = vmatpush1.msra.mxu0 0.0
    %417 = vmatprep.subr.mxu0 0.0
    %418 = vmatpush1.msra.mxu0 0.0
    %419 = vmatprep.subr.mxu0 0.0
    %420 = vmatpush1.msra.mxu0 0.0
    %421 = vmatprep.subr.mxu0 0.0
    %422 = vmatpush1.msra.mxu0 0.0
    %423 = vmatprep.subr.mxu0 0.0
    %424 = vmatpush1.msra.mxu0 0.0
    %425 = vmatprep.mubr.f32.mxu0 0.0
    %426 = vmatmul.mubr.f32.gmra.mrb[0].mxu0 %v346
    %v427 = vpop.f32.mrb[0].mxu0
    %v428 = vadd.f32 0.0, %v427
    %v429 = vpop.f32.mrb[0].mxu0
    %430 = vmatprep.mubr.f32.mxu0 0.0
    %431 = vmatmul.mubr.f32.gmra.mrb[0].mxu0 %v349
    %v432 = vpop.f32.mrb[0].mxu0
    %v433 = vadd.f32 0.0, %v432
    %v434 = vpop.f32.mrb[0].mxu0
    %435 = vmatprep.mubr.f32.mxu0 0.0
    %436 = vmatmul.mubr.f32.gmra.mrb[0].mxu0 %v352
    %v437 = vpop.f32.mrb[0].mxu0
    %v438 = vadd.f32 0.0, %v437
    %v439 = vpop.f32.mrb[0].mxu0
    %440 = vmatprep.mubr.f32.mxu0 0.0
    %441 = vmatmul.mubr.f32.gmra.mrb[0].mxu0 %v355
    %v442 = vpop.f32.mrb[0].mxu0
    %v443 = vadd.f32 0.0, %v442
    %v444 = vpop.f32.mrb[0].mxu0
    %445 = vdwg.mxu0
    %v446 = vld [vmem:[%s7 + $0x40] sm:$0xff]
    %v447 = vld [vmem:[%s7 + $0x48] sm:$0xff]
    %v448 = vld [vmem:[%s7 + $0x50] sm:$0x7]
    %vm449 = vcmask 23552
    %v451 = vsel %vm449, %v268, 0
    %v454 = vsel %vm449, %v269, 0
    %vm456 = vcmask 1042432
    %v458 = vsel %vm456, %v448, 0
    %460 = vmatprep.subr.mxu0 0.0
    %461 = vmatpush1.msra.mxu0 %v458
    %462 = vmatprep.subr.mxu0 0.0
    %463 = vmatpush1.msra.mxu0 0.0
    %464 = vmatprep.subr.mxu0 0.0
    %465 = vmatpush1.msra.mxu0 0.0
    %466 = vmatprep.subr.mxu0 0.0
    %467 = vmatpush1.msra.mxu0 0.0
    %468 = vmatprep.subr.mxu0 0.0
    %469 = vmatpush1.msra.mxu0 0.0
    %470 = vmatprep.subr.mxu0 0.0
    %471 = vmatpush1.msra.mxu0 0.0
    %472 = vmatprep.subr.mxu0 0.0
    %473 = vmatpush1.msra.mxu0 0.0
    %474 = vmatprep.subr.mxu0 0.0
    %475 = vmatpush1.msra.mxu0 0.0
    %476 = vmatprep.subr.mxu0 0.0
    %477 = vmatpush1.msra.mxu0 0.0
    %478 = vmatprep.subr.mxu0 0.0
    %479 = vmatpush1.msra.mxu0 0.0
    %480 = vmatprep.subr.mxu0 0.0
    %481 = vmatpush1.msra.mxu0 0.0
    %482 = vmatprep.subr.mxu0 0.0
    %483 = vmatpush1.msra.mxu0 0.0
    %484 = vmatprep.subr.mxu0 0.0
    %485 = vmatpush1.msra.mxu0 0.0
    %486 = vmatprep.subr.mxu0 0.0
    %487 = vmatpush1.msra.mxu0 0.0
    %488 = vmatprep.subr.mxu0 0.0
    %489 = vmatpush1.msra.mxu0 0.0
    %490 = vmatprep.subr.mxu0 0.0
    %491 = vmatpush1.msra.mxu0 0.0
    %492 = vmatprep.subr.mxu0 0.0
    %493 = vmatpush1.msra.mxu0 0.0
    %494 = vmatprep.subr.mxu0 0.0
    %495 = vmatpush1.msra.mxu0 0.0
    %496 = vmatprep.subr.mxu0 0.0
    %497 = vmatpush1.msra.mxu0 0.0
    %498 = vmatprep.subr.mxu0 0.0
    %499 = vmatpush1.msra.mxu0 0.0
    %500 = vmatprep.subr.mxu0 0.0
    %501 = vmatpush1.msra.mxu0 0.0
    %502 = vmatprep.subr.mxu0 0.0
    %503 = vmatpush1.msra.mxu0 0.0
    %504 = vmatprep.subr.mxu0 0.0
    %505 = vmatpush1.msra.mxu0 0.0
    %506 = vmatprep.subr.mxu0 0.0
    %507 = vmatpush1.msra.mxu0 0.0
    %508 = vmatprep.subr.mxu0 0.0
    %509 = vmatpush1.msra.mxu0 0.0
    %510 = vmatprep.subr.mxu0 0.0
    %511 = vmatpush1.msra.mxu0 0.0
    %512 = vmatprep.subr.mxu0 0.0
    %513 = vmatpush1.msra.mxu0 0.0
    %514 = vmatprep.subr.mxu0 0.0
    %515 = vmatpush1.msra.mxu0 0.0
    %516 = vmatprep.subr.mxu0 0.0
    %517 = vmatpush1.msra.mxu0 0.0
    %518 = vmatprep.subr.mxu0 0.0
    %519 = vmatpush1.msra.mxu0 0.0
    %520 = vmatprep.subr.mxu0 0.0
    %521 = vmatpush1.msra.mxu0 0.0
    %522 = vmatprep.subr.mxu0 0.0
    %523 = vmatpush1.msra.mxu0 0.0
    %524 = vmatprep.mubr.f32.mxu0 0.0
    %525 = vmatmul.mubr.f32.gmra.mrb[0].mxu0 %v451
    %v526 = vpop.f32.mrb[0].mxu0
    %v527 = vadd.f32 0.0, %v526
    %v528 = vpop.f32.mrb[0].mxu0
    %529 = vmatprep.mubr.f32.mxu0 0.0
    %530 = vmatmul.mubr.f32.gmra.mrb[0].mxu0 %v454
    %v531 = vpop.f32.mrb[0].mxu0
    %v532 = vadd.f32 0.0, %v531
    %v533 = vpop.f32.mrb[0].mxu0
    %534 = vdwg.mxu0
    %vm535 = vcmask 130048
    %v537 = vsel %vm535, %v266, 0
    %v540 = vsel %vm535, %v267, 0
    %542 = vmatprep.subr.mxu0 0.0
    %543 = vmatpush1.msra.mxu0 %v446
    %544 = vmatprep.subr.mxu0 0.0
    %545 = vmatpush1.msra.mxu0 %v447
    %546 = vmatprep.subr.mxu0 0.0
    %547 = vmatpush1.msra.mxu0 0.0
    %548 = vmatprep.subr.mxu0 0.0
    %549 = vmatpush1.msra.mxu0 0.0
    %550 = vmatprep.subr.mxu0 0.0
    %551 = vmatpush1.msra.mxu0 0.0
    %552 = vmatprep.subr.mxu0 0.0
    %553 = vmatpush1.msra.mxu0 0.0
    %554 = vmatprep.subr.mxu0 0.0
    %555 = vmatpush1.msra.mxu0 0.0
    %556 = vmatprep.subr.mxu0 0.0
    %557 = vmatpush1.msra.mxu0 0.0
    %558 = vmatprep.subr.mxu0 0.0
    %559 = vmatpush1.msra.mxu0 0.0
    %560 = vmatprep.subr.mxu0 0.0
    %561 = vmatpush1.msra.mxu0 0.0
    %562 = vmatprep.subr.mxu0 0.0
    %563 = vmatpush1.msra.mxu0 0.0
    %564 = vmatprep.subr.mxu0 0.0
    %565 = vmatpush1.msra.mxu0 0.0
    %566 = vmatprep.subr.mxu0 0.0
    %567 = vmatpush1.msra.mxu0 0.0
    %568 = vmatprep.subr.mxu0 0.0
    %569 = vmatpush1.msra.mxu0 0.0
    %570 = vmatprep.subr.mxu0 0.0
    %571 = vmatpush1.msra.mxu0 0.0
    %572 = vmatprep.subr.mxu0 0.0
    %573 = vmatpush1.msra.mxu0 0.0
    %574 = vmatprep.subr.mxu0 0.0
    %575 = vmatpush1.msra.mxu0 0.0
    %576 = vmatprep.subr.mxu0 0.0
    %577 = vmatpush1.msra.mxu0 0.0
    %578 = vmatprep.subr.mxu0 0.0
    %579 = vmatpush1.msra.mxu0 0.0
    %580 = vmatprep.subr.mxu0 0.0
    %581 = vmatpush1.msra.mxu0 0.0
    %582 = vmatprep.subr.mxu0 0.0
    %583 = vmatpush1.msra.mxu0 0.0
    %584 = vmatprep.subr.mxu0 0.0
    %585 = vmatpush1.msra.mxu0 0.0
    %586 = vmatprep.subr.mxu0 0.0
    %587 = vmatpush1.msra.mxu0 0.0
    %588 = vmatprep.subr.mxu0 0.0
    %589 = vmatpush1.msra.mxu0 0.0
    %590 = vmatprep.subr.mxu0 0.0
    %591 = vmatpush1.msra.mxu0 0.0
    %592 = vmatprep.subr.mxu0 0.0
    %593 = vmatpush1.msra.mxu0 0.0
    %594 = vmatprep.subr.mxu0 0.0
    %595 = vmatpush1.msra.mxu0 0.0
    %596 = vmatprep.subr.mxu0 0.0
    %597 = vmatpush1.msra.mxu0 0.0
    %598 = vmatprep.subr.mxu0 0.0
    %599 = vmatpush1.msra.mxu0 0.0
    %600 = vmatprep.subr.mxu0 0.0
    %601 = vmatpush1.msra.mxu0 0.0
    %602 = vmatprep.subr.mxu0 0.0
    %603 = vmatpush1.msra.mxu0 0.0
    %604 = vmatprep.subr.mxu0 0.0
    %605 = vmatpush1.msra.mxu0 0.0
    %606 = vmatprep.mubr.f32.mxu0 0.0
    %607 = vmatmul.mubr.f32.gmra.mrb[0].mxu0 %v537
    %v608 = vpop.f32.mrb[0].mxu0
    %v609 = vadd.f32 %v527, %v608
    %v610 = vpop.f32.mrb[0].mxu0
    %611 = vmatprep.mubr.f32.mxu0 0.0
    %612 = vmatmul.mubr.f32.gmra.mrb[0].mxu0 %v540
    %v613 = vpop.f32.mrb[0].mxu0
    %v614 = vadd.f32 %v532, %v613
    %v615 = vpop.f32.mrb[0].mxu0
    %616 = vdwg.mxu0
    %v617 = vld [vmem:[%s8 + $0x3] sm:$0x1]
    %v618 = vlaneseq
    %v619 = vshrl.u32 %v618, 7
    %v620 = vsub.s32 0, %v619
    %v621 = vrot.slane %v617, %v620
    %v622 = vadd.f32 %v609, %v621
    %v623 = vadd.f32 %v614, %v621
    %v624 = vld [vmem:[%s7 + $0x70] sm:$0xff]
    %v625 = vld [vmem:[%s7 + $0x78] sm:$0xff]
    %v626 = vld [vmem:[%s8 + $0x5] sm:$0x1]
    %vm627 = vcmask 89088
    %v629 = vsel %vm627, %v316, 0
    %v632 = vsel %vm627, %v317, 0
    %v635 = vsel %vm627, %v318, 0
    %v638 = vsel %vm627, %v319, 0
    %v641 = vsel %vm456, %v623, 0
    %643 = vmatprep.subr.mxu0 0.0
    %644 = vmatpush1.msra.mxu0 %v622
    %645 = vmatprep.subr.mxu0 0.0
    %646 = vmatpush1.msra.mxu0 %v641
    %647 = vmatprep.subr.mxu0 0.0
    %648 = vmatpush1.msra.mxu0 0.0
    %649 = vmatprep.subr.mxu0 0.0
    %650 = vmatpush1.msra.mxu0 0.0
    %651 = vmatprep.subr.mxu0 0.0
    %652 = vmatpush1.msra.mxu0 0.0
    %653 = vmatprep.subr.mxu0 0.0
    %654 = vmatpush1.msra.mxu0 0.0
    %655 = vmatprep.subr.mxu0 0.0
    %656 = vmatpush1.msra.mxu0 0.0
    %657 = vmatprep.subr.mxu0 0.0
    %658 = vmatpush1.msra.mxu0 0.0
    %659 = vmatprep.subr.mxu0 0.0
    %660 = vmatpush1.msra.mxu0 0.0
    %661 = vmatprep.subr.mxu0 0.0
    %662 = vmatpush1.msra.mxu0 0.0
    %663 = vmatprep.subr.mxu0 0.0
    %664 = vmatpush1.msra.mxu0 0.0
    %665 = vmatprep.subr.mxu0 0.0
    %666 = vmatpush1.msra.mxu0 0.0
    %667 = vmatprep.subr.mxu0 0.0
    %668 = vmatpush1.msra.mxu0 0.0
    %669 = vmatprep.subr.mxu0 0.0
    %670 = vmatpush1.msra.mxu0 0.0
    %671 = vmatprep.subr.mxu0 0.0
    %672 = vmatpush1.msra.mxu0 0.0
    %673 = vmatprep.subr.mxu0 0.0
    %674 = vmatpush1.msra.mxu0 0.0
    %675 = vmatprep.subr.mxu0 0.0
    %676 = vmatpush1.msra.mxu0 0.0
    %677 = vmatprep.subr.mxu0 0.0
    %678 = vmatpush1.msra.mxu0 0.0
    %679 = vmatprep.subr.mxu0 0.0
    %680 = vmatpush1.msra.mxu0 0.0
    %681 = vmatprep.subr.mxu0 0.0
    %682 = vmatpush1.msra.mxu0 0.0
    %683 = vmatprep.subr.mxu0 0.0
    %684 = vmatpush1.msra.mxu0 0.0
    %685 = vmatprep.subr.mxu0 0.0
    %686 = vmatpush1.msra.mxu0 0.0
    %687 = vmatprep.subr.mxu0 0.0
    %688 = vmatpush1.msra.mxu0 0.0
    %689 = vmatprep.subr.mxu0 0.0
    %690 = vmatpush1.msra.mxu0 0.0
    %691 = vmatprep.subr.mxu0 0.0
    %692 = vmatpush1.msra.mxu0 0.0
    %693 = vmatprep.subr.mxu0 0.0
    %694 = vmatpush1.msra.mxu0 0.0
    %695 = vmatprep.subr.mxu0 0.0
    %696 = vmatpush1.msra.mxu0 0.0
    %697 = vmatprep.subr.mxu0 0.0
    %698 = vmatpush1.msra.mxu0 0.0
    %699 = vmatprep.subr.mxu0 0.0
    %700 = vmatpush1.msra.mxu0 0.0
    %701 = vmatprep.subr.mxu0 0.0
    %702 = vmatpush1.msra.mxu0 0.0
    %703 = vmatprep.subr.mxu0 0.0
    %704 = vmatpush1.msra.mxu0 0.0
    %705 = vmatprep.subr.mxu0 0.0
    %706 = vmatpush1.msra.mxu0 0.0
    %707 = vmatprep.mubr.f32.mxu0 0.0
    %708 = vmatmul.mubr.f32.gmra.mrb[0].mxu0 %v629
    %v709 = vpop.f32.mrb[0].mxu0
    %v710 = vadd.f32 0.0, %v709
    %v711 = vpop.f32.mrb[0].mxu0
    %712 = vmatprep.mubr.f32.mxu0 0.0
    %713 = vmatmul.mubr.f32.gmra.mrb[0].mxu0 %v632
    %v714 = vpop.f32.mrb[0].mxu0
    %v715 = vadd.f32 0.0, %v714
    %v716 = vpop.f32.mrb[0].mxu0
    %717 = vmatprep.mubr.f32.mxu0 0.0
    %718 = vmatmul.mubr.f32.gmra.mrb[0].mxu0 %v635
    %v719 = vpop.f32.mrb[0].mxu0
    %v720 = vadd.f32 0.0, %v719
    %v721 = vpop.f32.mrb[0].mxu0
    %722 = vmatprep.mubr.f32.mxu0 0.0
    %723 = vmatmul.mubr.f32.gmra.mrb[0].mxu0 %v638
    %v724 = vpop.f32.mrb[0].mxu0
    %v725 = vadd.f32 0.0, %v724
    %v726 = vpop.f32.mrb[0].mxu0
    %727 = vdwg.mxu0
    %729 = vrot.lane.b32.xlu0 %v622, 112
    %v730 = vpop.permute.xlu0 %729
    %731 = vrot.lane.b32.xlu0 %v623, 112
    %v732 = vpop.permute.xlu0 %731
    %v735 = vsel %vm627, %v324, 0
    %v738 = vsel %vm627, %v325, 0
    %v741 = vsel %vm627, %v326, 0
    %v744 = vsel %vm627, %v327, 0
    %v746 = vsel %vm456, %v732, 0
    %748 = vmatprep.subr.mxu0 0.0
    %749 = vmatpush1.msra.mxu0 %v730
    %750 = vmatprep.subr.mxu0 0.0
    %751 = vmatpush1.msra.mxu0 %v746
    %752 = vmatprep.subr.mxu0 0.0
    %753 = vmatpush1.msra.mxu0 0.0
    %754 = vmatprep.subr.mxu0 0.0
    %755 = vmatpush1.msra.mxu0 0.0
    %756 = vmatprep.subr.mxu0 0.0
    %757 = vmatpush1.msra.mxu0 0.0
    %758 = vmatprep.subr.mxu0 0.0
    %759 = vmatpush1.msra.mxu0 0.0
    %760 = vmatprep.subr.mxu0 0.0
    %761 = vmatpush1.msra.mxu0 0.0
    %762 = vmatprep.subr.mxu0 0.0
    %763 = vmatpush1.msra.mxu0 0.0
    %764 = vmatprep.subr.mxu0 0.0
    %765 = vmatpush1.msra.mxu0 0.0
    %766 = vmatprep.subr.mxu0 0.0
    %767 = vmatpush1.msra.mxu0 0.0
    %768 = vmatprep.subr.mxu0 0.0
    %769 = vmatpush1.msra.mxu0 0.0
    %770 = vmatprep.subr.mxu0 0.0
    %771 = vmatpush1.msra.mxu0 0.0
    %772 = vmatprep.subr.mxu0 0.0
    %773 = vmatpush1.msra.mxu0 0.0
    %774 = vmatprep.subr.mxu0 0.0
    %775 = vmatpush1.msra.mxu0 0.0
    %776 = vmatprep.subr.mxu0 0.0
    %777 = vmatpush1.msra.mxu0 0.0
    %778 = vmatprep.subr.mxu0 0.0
    %779 = vmatpush1.msra.mxu0 0.0
    %780 = vmatprep.subr.mxu0 0.0
    %781 = vmatpush1.msra.mxu0 0.0
    %782 = vmatprep.subr.mxu0 0.0
    %783 = vmatpush1.msra.mxu0 0.0
    %784 = vmatprep.subr.mxu0 0.0
    %785 = vmatpush1.msra.mxu0 0.0
    %786 = vmatprep.subr.mxu0 0.0
    %787 = vmatpush1.msra.mxu0 0.0
    %788 = vmatprep.subr.mxu0 0.0
    %789 = vmatpush1.msra.mxu0 0.0
    %790 = vmatprep.subr.mxu0 0.0
    %791 = vmatpush1.msra.mxu0 0.0
    %792 = vmatprep.subr.mxu0 0.0
    %793 = vmatpush1.msra.mxu0 0.0
    %794 = vmatprep.subr.mxu0 0.0
    %795 = vmatpush1.msra.mxu0 0.0
    %796 = vmatprep.subr.mxu0 0.0
    %797 = vmatpush1.msra.mxu0 0.0
    %798 = vmatprep.subr.mxu0 0.0
    %799 = vmatpush1.msra.mxu0 0.0
    %800 = vmatprep.subr.mxu0 0.0
    %801 = vmatpush1.msra.mxu0 0.0
    %802 = vmatprep.subr.mxu0 0.0
    %803 = vmatpush1.msra.mxu0 0.0
    %804 = vmatprep.subr.mxu0 0.0
    %805 = vmatpush1.msra.mxu0 0.0
    %806 = vmatprep.subr.mxu0 0.0
    %807 = vmatpush1.msra.mxu0 0.0
    %808 = vmatprep.subr.mxu0 0.0
    %809 = vmatpush1.msra.mxu0 0.0
    %810 = vmatprep.subr.mxu0 0.0
    %811 = vmatpush1.msra.mxu0 0.0
    %812 = vmatprep.mubr.f32.mxu0 0.0
    %813 = vmatmul.mubr.f32.gmra.mrb[0].mxu0 %v735
    %v814 = vpop.f32.mrb[0].mxu0
    %v815 = vadd.f32 0.0, %v814
    %v816 = vpop.f32.mrb[0].mxu0
    %817 = vmatprep.mubr.f32.mxu0 0.0
    %818 = vmatmul.mubr.f32.gmra.mrb[0].mxu0 %v738
    %v819 = vpop.f32.mrb[0].mxu0
    %v820 = vadd.f32 0.0, %v819
    %v821 = vpop.f32.mrb[0].mxu0
    %822 = vmatprep.mubr.f32.mxu0 0.0
    %823 = vmatmul.mubr.f32.gmra.mrb[0].mxu0 %v741
    %v824 = vpop.f32.mrb[0].mxu0
    %v825 = vadd.f32 0.0, %v824
    %v826 = vpop.f32.mrb[0].mxu0
    %827 = vmatprep.mubr.f32.mxu0 0.0
    %828 = vmatmul.mubr.f32.gmra.mrb[0].mxu0 %v744
    %v829 = vpop.f32.mrb[0].mxu0
    %v830 = vadd.f32 0.0, %v829
    %v831 = vpop.f32.mrb[0].mxu0
    %832 = vdwg.mxu0
    %v833 = vadd.f32 %v710, %v815
    %v834 = vadd.f32 %v715, %v820
    %v835 = vadd.f32 %v720, %v825
    %v836 = vadd.f32 %v725, %v830
    %v837 = vadd.f32 %v833, %v428
    %v838 = vadd.f32 %v834, %v433
    %v839 = vadd.f32 %v835, %v438
    %v840 = vadd.f32 %v836, %v443
    %vm841 = vcmp.gt.f32.partialorder %v837, 0.0
    %vm842 = vcmp.gt.f32.partialorder %v838, 0.0
    %vm843 = vcmp.gt.f32.partialorder %v839, 0.0
    %vm844 = vcmp.gt.f32.partialorder %v840, 0.0
    %v845 = vmul.f32 %v837, 0.2
    %v846 = vmul.f32 %v838, 0.2
    %v847 = vmul.f32 %v839, 0.2
    %v848 = vmul.f32 %v840, 0.2
    %v849 = vsel %vm841, %v837, %v845
    %v850 = vsel %vm842, %v838, %v846
    %v851 = vsel %vm843, %v839, %v847
    %v852 = vsel %vm844, %v840, %v848
    %v854 = vsel %vm535, %v849, 0
    %v857 = vsel %vm535, %v850, 0
    %v860 = vsel %vm535, %v851, 0
    %v863 = vsel %vm535, %v852, 0
    %865 = vmatprep.subr.mxu0 0.0
    %866 = vmatpush1.msra.mxu0 %v624
    %867 = vmatprep.subr.mxu0 0.0
    %868 = vmatpush1.msra.mxu0 %v625
    %869 = vmatprep.subr.mxu0 0.0
    %870 = vmatpush1.msra.mxu0 0.0
    %871 = vmatprep.subr.mxu0 0.0
    %872 = vmatpush1.msra.mxu0 0.0
    %873 = vmatprep.subr.mxu0 0.0
    %874 = vmatpush1.msra.mxu0 0.0
    %875 = vmatprep.subr.mxu0 0.0
    %876 = vmatpush1.msra.mxu0 0.0
    %877 = vmatprep.subr.mxu0 0.0
    %878 = vmatpush1.msra.mxu0 0.0
    %879 = vmatprep.subr.mxu0 0.0
    %880 = vmatpush1.msra.mxu0 0.0
    %881 = vmatprep.subr.mxu0 0.0
    %882 = vmatpush1.msra.mxu0 0.0
    %883 = vmatprep.subr.mxu0 0.0
    %884 = vmatpush1.msra.mxu0 0.0
    %885 = vmatprep.subr.mxu0 0.0
    %886 = vmatpush1.msra.mxu0 0.0
    %887 = vmatprep.subr.mxu0 0.0
    %888 = vmatpush1.msra.mxu0 0.0
    %889 = vmatprep.subr.mxu0 0.0
    %890 = vmatpush1.msra.mxu0 0.0
    %891 = vmatprep.subr.mxu0 0.0
    %892 = vmatpush1.msra.mxu0 0.0
    %893 = vmatprep.subr.mxu0 0.0
    %894 = vmatpush1.msra.mxu0 0.0
    %895 = vmatprep.subr.mxu0 0.0
    %896 = vmatpush1.msra.mxu0 0.0
    %897 = vmatprep.subr.mxu0 0.0
    %898 = vmatpush1.msra.mxu0 0.0
    %899 = vmatprep.subr.mxu0 0.0
    %900 = vmatpush1.msra.mxu0 0.0
    %901 = vmatprep.subr.mxu0 0.0
    %902 = vmatpush1.msra.mxu0 0.0
    %903 = vmatprep.subr.mxu0 0.0
    %904 = vmatpush1.msra.mxu0 0.0
    %905 = vmatprep.subr.mxu0 0.0
    %906 = vmatpush1.msra.mxu0 0.0
    %907 = vmatprep.subr.mxu0 0.0
    %908 = vmatpush1.msra.mxu0 0.0
    %909 = vmatprep.subr.mxu0 0.0
    %910 = vmatpush1.msra.mxu0 0.0
    %911 = vmatprep.subr.mxu0 0.0
    %912 = vmatpush1.msra.mxu0 0.0
    %913 = vmatprep.subr.mxu0 0.0
    %914 = vmatpush1.msra.mxu0 0.0
    %915 = vmatprep.subr.mxu0 0.0
    %916 = vmatpush1.msra.mxu0 0.0
    %917 = vmatprep.subr.mxu0 0.0
    %918 = vmatpush1.msra.mxu0 0.0
    %919 = vmatprep.subr.mxu0 0.0
    %920 = vmatpush1.msra.mxu0 0.0
    %921 = vmatprep.subr.mxu0 0.0
    %922 = vmatpush1.msra.mxu0 0.0
    %923 = vmatprep.subr.mxu0 0.0
    %924 = vmatpush1.msra.mxu0 0.0
    %925 = vmatprep.subr.mxu0 0.0
    %926 = vmatpush1.msra.mxu0 0.0
    %927 = vmatprep.subr.mxu0 0.0
    %928 = vmatpush1.msra.mxu0 0.0
    %929 = vmatprep.mubr.f32.mxu0 0.0
    %930 = vmatmul.mubr.f32.gmra.mrb[0].mxu0 %v854
    %v931 = vpop.f32.mrb[0].mxu0
    %v932 = vadd.f32 0.0, %v931
    %v933 = vpop.f32.mrb[0].mxu0
    %934 = vmatprep.mubr.f32.mxu0 0.0
    %935 = vmatmul.mubr.f32.gmra.mrb[0].mxu0 %v857
    %v936 = vpop.f32.mrb[0].mxu0
    %v937 = vadd.f32 0.0, %v936
    %v938 = vpop.f32.mrb[0].mxu0
    %939 = vmatprep.mubr.f32.mxu0 0.0
    %940 = vmatmul.mubr.f32.gmra.mrb[0].mxu0 %v860
    %v941 = vpop.f32.mrb[0].mxu0
    %v942 = vadd.f32 0.0, %v941
    %v943 = vpop.f32.mrb[0].mxu0
    %944 = vmatprep.mubr.f32.mxu0 0.0
    %945 = vmatmul.mubr.f32.gmra.mrb[0].mxu0 %v863
    %v946 = vpop.f32.mrb[0].mxu0
    %v947 = vadd.f32 0.0, %v946
    %v948 = vpop.f32.mrb[0].mxu0
    %949 = vdwg.mxu0
    %951 = vset.pattern.permute.xlu0 0
    %952 = vperm.xlu0 %951, %v932
    %v953 = vpop.permute.xlu0 %952
    %956 = vset.pattern.permute.xlu0 0
    %957 = vperm.xlu0 %956, %v937
    %v958 = vpop.permute.xlu0 %957
    %961 = vset.pattern.permute.xlu0 0
    %962 = vperm.xlu0 %961, %v942
    %v963 = vpop.permute.xlu0 %962
    %966 = vset.pattern.permute.xlu0 0
    %967 = vperm.xlu0 %966, %v947
    %v968 = vpop.permute.xlu0 %967
    %v970 = vsel %vm308, %v953, -1e+30
    %v971 = vsel %vm309, %v958, -1e+30
    %v972 = vsel %vm310, %v963, -1e+30
    %v973 = vsel %vm311, %v968, -1e+30
    %v974 = vsel %vm627, %v970, -inf
    %v975 = vsel %vm627, %v971, -inf
    %v976 = vsel %vm627, %v972, -inf
    %vm977 = vcmask 88064
    %v978 = vsel %vm977, %v973, -inf
    %v979 = vmax.f32 %v974, %v975
    %v980 = vmax.f32 %v976, %v978
    %v981 = vmax.f32 %v979, %v980
    %v982 = vrot.slane %v981, 4
    %v983 = vmax.f32 %v981, %v982
    %v984 = vrot.slane %v983, 2
    %v985 = vmax.f32 %v983, %v984
    %v986 = vrot.slane %v985, 1
    %v987 = vmax.f32 %v985, %v986
    %v988 = vsub.f32 %v970, %v987
    %v989 = vsub.f32 %v971, %v987
    %v990 = vsub.f32 %v972, %v987
    %v991 = vsub.f32 %v973, %v987
    %v992 = vmul.f32 %v988, 1.442695
    %v993 = vpow.pop %v992
    %v994 = vmul.f32 %v989, 1.442695
    %v995 = vpow.pop %v994
    %v996 = vmul.f32 %v990, 1.442695
    %v997 = vpow.pop %v996
    %v998 = vmul.f32 %v991, 1.442695
    %v999 = vpow.pop %v998
    %v1000 = vsel %vm308, %v993, 0.0
    %v1001 = vsel %vm309, %v995, 0.0
    %v1002 = vsel %vm310, %v997, 0.0
    %v1003 = vsel %vm311, %v999, 0.0
    %v1004 = vsel %vm627, %v1000, 0.0
    %v1005 = vsel %vm627, %v1001, 0.0
    %v1006 = vadd.f32 %v1004, %v1005
    %v1007 = vsel %vm627, %v1002, 0.0
    %v1008 = vadd.f32 %v1006, %v1007
    %v1009 = vsel %vm977, %v1003, 0.0
    %v1010 = vadd.f32 %v1008, %v1009
    %v1011 = vrot.slane %v1010, 4
    %v1012 = vadd.f32 %v1010, %v1011
    %v1013 = vrot.slane %v1012, 2
    %v1014 = vadd.f32 %v1012, %v1013
    %v1015 = vrot.slane %v1014, 1
    %v1016 = vadd.f32 %v1014, %v1015
    %v1017 = vmul.f32 %v324, %v987
    %v1018 = vmul.f32 %v325, %v987
    %v1019 = vmul.f32 %v326, %v987
    %v1020 = vmul.f32 %v327, %v987
    %v1021 = vsel %vm627, %v1017, 0.0
    %1022 = vadd.xlane.f32.xlu0 %v1021
    %v1023 = vpop.xlane.xlu0 %1022
    %v1024 = vsel %vm627, %v1018, 0.0
    %1025 = vadd.xlane.f32.xlu0 %v1024
    %v1026 = vpop.xlane.xlu0 %1025
    %v1027 = vsel %vm627, %v1019, 0.0
    %1028 = vadd.xlane.f32.xlu0 %v1027
    %v1029 = vpop.xlane.xlu0 %1028
    %v1030 = vsel %vm977, %v1020, 0.0
    %1031 = vadd.xlane.f32.xlu0 %v1030
    %v1032 = vpop.xlane.xlu0 %1031
    %v1033 = vmul.f32 %v324, %v1016
    %v1034 = vmul.f32 %v325, %v1016
    %v1035 = vmul.f32 %v326, %v1016
    %v1036 = vmul.f32 %v327, %v1016
    %v1037 = vsel %vm627, %v1033, 0.0
    %1038 = vadd.xlane.f32.xlu0 %v1037
    %v1039 = vpop.xlane.xlu0 %1038
    %v1040 = vsel %vm627, %v1034, 0.0
    %1041 = vadd.xlane.f32.xlu0 %v1040
    %v1042 = vpop.xlane.xlu0 %1041
    %v1043 = vsel %vm627, %v1035, 0.0
    %1044 = vadd.xlane.f32.xlu0 %v1043
    %v1045 = vpop.xlane.xlu0 %1044
    %v1046 = vsel %vm977, %v1036, 0.0
    %1047 = vadd.xlane.f32.xlu0 %v1046
    %v1048 = vpop.xlane.xlu0 %1047
    %v1049 = vsub.f32 %v932, %v1023
    %v1050 = vsub.f32 %v937, %v1026
    %v1051 = vsub.f32 %v942, %v1029
    %v1052 = vsub.f32 %v947, %v1032
    %v1053 = vmul.f32 %v1049, 1.442695
    %v1054 = vpow.pop %v1053
    %v1055 = vmul.f32 %v1050, 1.442695
    %v1056 = vpow.pop %v1055
    %v1057 = vmul.f32 %v1051, 1.442695
    %v1058 = vpow.pop %v1057
    %v1059 = vmul.f32 %v1052, 1.442695
    %v1060 = vpow.pop %v1059
    %v1061 = vrcp.pop %v1039
    %v1062 = vrcp.pop %v1042
    %v1063 = vrcp.pop %v1045
    %v1064 = vrcp.pop %v1048
    %v1065 = vmul.f32 %v1054, %v1061
    %v1066 = vmul.f32 %v1056, %v1062
    %v1067 = vmul.f32 %v1058, %v1063
    %v1068 = vmul.f32 %v1060, %v1064
    %1070 = vset.pattern.permute.xlu0 0
    %1071 = vperm.xlu0 %1070, %v1065
    %v1072 = vpop.permute.xlu0 %1071
    %1075 = vset.pattern.permute.xlu0 0
    %1076 = vperm.xlu0 %1075, %v1066
    %v1077 = vpop.permute.xlu0 %1076
    %1080 = vset.pattern.permute.xlu0 0
    %1081 = vperm.xlu0 %1080, %v1067
    %v1082 = vpop.permute.xlu0 %1081
    %1085 = vset.pattern.permute.xlu0 0
    %1086 = vperm.xlu0 %1085, %v1068
    %v1087 = vpop.permute.xlu0 %1086
    %v1089 = vmul.f32 %v710, %v1072
    %v1090 = vmul.f32 %v715, %v1077
    %v1091 = vmul.f32 %v720, %v1082
    %v1092 = vmul.f32 %v725, %v1087
    %v1093 = vlaneseq
    %v1094 = vshrl.u32 %v1093, 7
    %v1095 = vsub.s32 0, %v1094
    %v1096 = vrot.slane %v626, %v1095
    %vm1097 = vcmask 252928
    %v1099 = vsel %vm1097, %v337, 0
    %v1102 = vsel %vm1097, %v338, 0
    %vm1104 = vcmask 1046528
    %v1106 = vsel %vm1104, %v1092, 0
    %1108 = vmatprep.subr.mxu0 0.0
    %1109 = vmatpush1.msra.mxu0 %v1089
    %1110 = vmatprep.subr.mxu0 0.0
    %1111 = vmatpush1.msra.mxu0 %v1090
    %1112 = vmatprep.subr.mxu0 0.0
    %1113 = vmatpush1.msra.mxu0 %v1091
    %1114 = vmatprep.subr.mxu0 0.0
    %1115 = vmatpush1.msra.mxu0 %v1106
    %1116 = vmatprep.subr.mxu0 0.0
    %1117 = vmatpush1.msra.mxu0 0.0
    %1118 = vmatprep.subr.mxu0 0.0
    %1119 = vmatpush1.msra.mxu0 0.0
    %1120 = vmatprep.subr.mxu0 0.0
    %1121 = vmatpush1.msra.mxu0 0.0
    %1122 = vmatprep.subr.mxu0 0.0
    %1123 = vmatpush1.msra.mxu0 0.0
    %1124 = vmatprep.subr.mxu0 0.0
    %1125 = vmatpush1.msra.mxu0 0.0
    %1126 = vmatprep.subr.mxu0 0.0
    %1127 = vmatpush1.msra.mxu0 0.0
    %1128 = vmatprep.subr.mxu0 0.0
    %1129 = vmatpush1.msra.mxu0 0.0
    %1130 = vmatprep.subr.mxu0 0.0
    %1131 = vmatpush1.msra.mxu0 0.0
    %1132 = vmatprep.subr.mxu0 0.0
    %1133 = vmatpush1.msra.mxu0 0.0
    %1134 = vmatprep.subr.mxu0 0.0
    %1135 = vmatpush1.msra.mxu0 0.0
    %1136 = vmatprep.subr.mxu0 0.0
    %1137 = vmatpush1.msra.mxu0 0.0
    %1138 = vmatprep.subr.mxu0 0.0
    %1139 = vmatpush1.msra.mxu0 0.0
    %1140 = vmatprep.subr.mxu0 0.0
    %1141 = vmatpush1.msra.mxu0 0.0
    %1142 = vmatprep.subr.mxu0 0.0
    %1143 = vmatpush1.msra.mxu0 0.0
    %1144 = vmatprep.subr.mxu0 0.0
    %1145 = vmatpush1.msra.mxu0 0.0
    %1146 = vmatprep.subr.mxu0 0.0
    %1147 = vmatpush1.msra.mxu0 0.0
    %1148 = vmatprep.subr.mxu0 0.0
    %1149 = vmatpush1.msra.mxu0 0.0
    %1150 = vmatprep.subr.mxu0 0.0
    %1151 = vmatpush1.msra.mxu0 0.0
    %1152 = vmatprep.subr.mxu0 0.0
    %1153 = vmatpush1.msra.mxu0 0.0
    %1154 = vmatprep.subr.mxu0 0.0
    %1155 = vmatpush1.msra.mxu0 0.0
    %1156 = vmatprep.subr.mxu0 0.0
    %1157 = vmatpush1.msra.mxu0 0.0
    %1158 = vmatprep.subr.mxu0 0.0
    %1159 = vmatpush1.msra.mxu0 0.0
    %1160 = vmatprep.subr.mxu0 0.0
    %1161 = vmatpush1.msra.mxu0 0.0
    %1162 = vmatprep.subr.mxu0 0.0
    %1163 = vmatpush1.msra.mxu0 0.0
    %1164 = vmatprep.subr.mxu0 0.0
    %1165 = vmatpush1.msra.mxu0 0.0
    %1166 = vmatprep.subr.mxu0 0.0
    %1167 = vmatpush1.msra.mxu0 0.0
    %1168 = vmatprep.subr.mxu0 0.0
    %1169 = vmatpush1.msra.mxu0 0.0
    %1170 = vmatprep.subr.mxu0 0.0
    %1171 = vmatpush1.msra.mxu0 0.0
    %1172 = vmatprep.mubr.f32.mxu0 0.0
    %1173 = vmatmul.mubr.f32.gmra.mrb[0].mxu0 %v1099
    %v1174 = vpop.f32.mrb[0].mxu0
    %v1175 = vadd.f32 %v1096, %v1174
    %v1176 = vpop.f32.mrb[0].mxu0
    %1177 = vmatprep.mubr.f32.mxu0 0.0
    %1178 = vmatmul.mubr.f32.gmra.mrb[0].mxu0 %v1102
    %v1179 = vpop.f32.mrb[0].mxu0
    %v1180 = vadd.f32 %v1096, %v1179
    %v1181 = vpop.f32.mrb[0].mxu0
    %1182 = vdwg.mxu0
    %vm1183 = vcmp.gt.f32.partialorder %v1175, 0.0
    %vm1184 = vcmp.gt.f32.partialorder %v1180, 0.0
    %v1185 = vmin.f32 %v1175, 0.0
    %v1186 = vmin.f32 %v1180, 0.0
    %v1187 = vmul.f32 %v1185, 1.442695
    %v1188 = vpow.pop %v1187
    %v1189 = vmul.f32 %v1186, 1.442695
    %v1190 = vpow.pop %v1189
    %v1191 = vsub.f32 %v1188, 1.0
    %v1192 = vsub.f32 %v1190, 1.0
    %v1193 = vsel %vm1183, %v1175, %v1191
    %v1194 = vsel %vm1184, %v1180, %v1192
    %v1195 = vld [vmem:[%s7 + $0x58] sm:$0xff]
    %v1196 = vld [vmem:[%s7 + $0x60] sm:$0xff]
    %v1197 = vld [vmem:[%s8 + $0x4] sm:$0x1]
    %v1198 = vlaneseq
    %v1199 = vshrl.u32 %v1198, 7
    %v1200 = vsub.s32 0, %v1199
    %v1201 = vrot.slane %v1197, %v1200
    %v1203 = vsel %vm535, %v1193, 0
    %v1206 = vsel %vm535, %v1194, 0
    %1208 = vmatprep.subr.mxu0 0.0
    %1209 = vmatpush1.msra.mxu0 %v1195
    %1210 = vmatprep.subr.mxu0 0.0
    %1211 = vmatpush1.msra.mxu0 %v1196
    %1212 = vmatprep.subr.mxu0 0.0
    %1213 = vmatpush1.msra.mxu0 0.0
    %1214 = vmatprep.subr.mxu0 0.0
    %1215 = vmatpush1.msra.mxu0 0.0
    %1216 = vmatprep.subr.mxu0 0.0
    %1217 = vmatpush1.msra.mxu0 0.0
    %1218 = vmatprep.subr.mxu0 0.0
    %1219 = vmatpush1.msra.mxu0 0.0
    %1220 = vmatprep.subr.mxu0 0.0
    %1221 = vmatpush1.msra.mxu0 0.0
    %1222 = vmatprep.subr.mxu0 0.0
    %1223 = vmatpush1.msra.mxu0 0.0
    %1224 = vmatprep.subr.mxu0 0.0
    %1225 = vmatpush1.msra.mxu0 0.0
    %1226 = vmatprep.subr.mxu0 0.0
    %1227 = vmatpush1.msra.mxu0 0.0
    %1228 = vmatprep.subr.mxu0 0.0
    %1229 = vmatpush1.msra.mxu0 0.0
    %1230 = vmatprep.subr.mxu0 0.0
    %1231 = vmatpush1.msra.mxu0 0.0
    %1232 = vmatprep.subr.mxu0 0.0
    %1233 = vmatpush1.msra.mxu0 0.0
    %1234 = vmatprep.subr.mxu0 0.0
    %1235 = vmatpush1.msra.mxu0 0.0
    %1236 = vmatprep.subr.mxu0 0.0
    %1237 = vmatpush1.msra.mxu0 0.0
    %1238 = vmatprep.subr.mxu0 0.0
    %1239 = vmatpush1.msra.mxu0 0.0
    %1240 = vmatprep.subr.mxu0 0.0
    %1241 = vmatpush1.msra.mxu0 0.0
    %1242 = vmatprep.subr.mxu0 0.0
    %1243 = vmatpush1.msra.mxu0 0.0
    %1244 = vmatprep.subr.mxu0 0.0
    %1245 = vmatpush1.msra.mxu0 0.0
    %1246 = vmatprep.subr.mxu0 0.0
    %1247 = vmatpush1.msra.mxu0 0.0
    %1248 = vmatprep.subr.mxu0 0.0
    %1249 = vmatpush1.msra.mxu0 0.0
    %1250 = vmatprep.subr.mxu0 0.0
    %1251 = vmatpush1.msra.mxu0 0.0
    %1252 = vmatprep.subr.mxu0 0.0
    %1253 = vmatpush1.msra.mxu0 0.0
    %1254 = vmatprep.subr.mxu0 0.0
    %1255 = vmatpush1.msra.mxu0 0.0
    %1256 = vmatprep.subr.mxu0 0.0
    %1257 = vmatpush1.msra.mxu0 0.0
    %1258 = vmatprep.subr.mxu0 0.0
    %1259 = vmatpush1.msra.mxu0 0.0
    %1260 = vmatprep.subr.mxu0 0.0
    %1261 = vmatpush1.msra.mxu0 0.0
    %1262 = vmatprep.subr.mxu0 0.0
    %1263 = vmatpush1.msra.mxu0 0.0
    %1264 = vmatprep.subr.mxu0 0.0
    %1265 = vmatpush1.msra.mxu0 0.0
    %1266 = vmatprep.subr.mxu0 0.0
    %1267 = vmatpush1.msra.mxu0 0.0
    %1268 = vmatprep.subr.mxu0 0.0
    %1269 = vmatpush1.msra.mxu0 0.0
    %1270 = vmatprep.subr.mxu0 0.0
    %1271 = vmatpush1.msra.mxu0 0.0
    %1272 = vmatprep.mubr.f32.mxu0 0.0
    %1273 = vmatmul.mubr.f32.gmra.mrb[0].mxu0 %v1203
    %v1274 = vpop.f32.mrb[0].mxu0
    %v1275 = vadd.f32 %v1201, %v1274
    %v1276 = vpop.f32.mrb[0].mxu0
    %1277 = vmatprep.mubr.f32.mxu0 0.0
    %1278 = vmatmul.mubr.f32.gmra.mrb[0].mxu0 %v1206
    %v1279 = vpop.f32.mrb[0].mxu0
    %v1280 = vadd.f32 %v1201, %v1279
    %v1281 = vpop.f32.mrb[0].mxu0
    %1282 = vdwg.mxu0
    %v1283 = vld [vmem:[%s7 + $0x80] sm:$0xff]
    %v1284 = vld [vmem:[%s7 + $0x88] sm:$0xff]
    %v1285 = vld [vmem:[%s8 + $0x6] sm:$0x1]
    %v1287 = vsel %vm456, %v1280, 0
    %1289 = vmatprep.subr.mxu0 0.0
    %1290 = vmatpush1.msra.mxu0 %v1275
    %1291 = vmatprep.subr.mxu0 0.0
    %1292 = vmatpush1.msra.mxu0 %v1287
    %1293 = vmatprep.subr.mxu0 0.0
    %1294 = vmatpush1.msra.mxu0 0.0
    %1295 = vmatprep.subr.mxu0 0.0
    %1296 = vmatpush1.msra.mxu0 0.0
    %1297 = vmatprep.subr.mxu0 0.0
    %1298 = vmatpush1.msra.mxu0 0.0
    %1299 = vmatprep.subr.mxu0 0.0
    %1300 = vmatpush1.msra.mxu0 0.0
    %1301 = vmatprep.subr.mxu0 0.0
    %1302 = vmatpush1.msra.mxu0 0.0
    %1303 = vmatprep.subr.mxu0 0.0
    %1304 = vmatpush1.msra.mxu0 0.0
    %1305 = vmatprep.subr.mxu0 0.0
    %1306 = vmatpush1.msra.mxu0 0.0
    %1307 = vmatprep.subr.mxu0 0.0
    %1308 = vmatpush1.msra.mxu0 0.0
    %1309 = vmatprep.subr.mxu0 0.0
    %1310 = vmatpush1.msra.mxu0 0.0
    %1311 = vmatprep.subr.mxu0 0.0
    %1312 = vmatpush1.msra.mxu0 0.0
    %1313 = vmatprep.subr.mxu0 0.0
    %1314 = vmatpush1.msra.mxu0 0.0
    %1315 = vmatprep.subr.mxu0 0.0
    %1316 = vmatpush1.msra.mxu0 0.0
    %1317 = vmatprep.subr.mxu0 0.0
    %1318 = vmatpush1.msra.mxu0 0.0
    %1319 = vmatprep.subr.mxu0 0.0
    %1320 = vmatpush1.msra.mxu0 0.0
    %1321 = vmatprep.subr.mxu0 0.0
    %1322 = vmatpush1.msra.mxu0 0.0
    %1323 = vmatprep.subr.mxu0 0.0
    %1324 = vmatpush1.msra.mxu0 0.0
    %1325 = vmatprep.subr.mxu0 0.0
    %1326 = vmatpush1.msra.mxu0 0.0
    %1327 = vmatprep.subr.mxu0 0.0
    %1328 = vmatpush1.msra.mxu0 0.0
    %1329 = vmatprep.subr.mxu0 0.0
    %1330 = vmatpush1.msra.mxu0 0.0
    %1331 = vmatprep.subr.mxu0 0.0
    %1332 = vmatpush1.msra.mxu0 0.0
    %1333 = vmatprep.subr.mxu0 0.0
    %1334 = vmatpush1.msra.mxu0 0.0
    %1335 = vmatprep.subr.mxu0 0.0
    %1336 = vmatpush1.msra.mxu0 0.0
    %1337 = vmatprep.subr.mxu0 0.0
    %1338 = vmatpush1.msra.mxu0 0.0
    %1339 = vmatprep.subr.mxu0 0.0
    %1340 = vmatpush1.msra.mxu0 0.0
    %1341 = vmatprep.subr.mxu0 0.0
    %1342 = vmatpush1.msra.mxu0 0.0
    %1343 = vmatprep.subr.mxu0 0.0
    %1344 = vmatpush1.msra.mxu0 0.0
    %1345 = vmatprep.subr.mxu0 0.0
    %1346 = vmatpush1.msra.mxu0 0.0
    %1347 = vmatprep.subr.mxu0 0.0
    %1348 = vmatpush1.msra.mxu0 0.0
    %1349 = vmatprep.subr.mxu0 0.0
    %1350 = vmatpush1.msra.mxu0 0.0
    %1351 = vmatprep.subr.mxu0 0.0
    %1352 = vmatpush1.msra.mxu0 0.0
    %1353 = vmatprep.mubr.f32.mxu0 0.0
    %1354 = vmatmul.mubr.f32.gmra.mrb[0].mxu0 %v629
    %v1355 = vpop.f32.mrb[0].mxu0
    %v1356 = vadd.f32 0.0, %v1355
    %v1357 = vpop.f32.mrb[0].mxu0
    %1358 = vmatprep.mubr.f32.mxu0 0.0
    %1359 = vmatmul.mubr.f32.gmra.mrb[0].mxu0 %v632
    %v1360 = vpop.f32.mrb[0].mxu0
    %v1361 = vadd.f32 0.0, %v1360
    %v1362 = vpop.f32.mrb[0].mxu0
    %1363 = vmatprep.mubr.f32.mxu0 0.0
    %1364 = vmatmul.mubr.f32.gmra.mrb[0].mxu0 %v635
    %v1365 = vpop.f32.mrb[0].mxu0
    %v1366 = vadd.f32 0.0, %v1365
    %v1367 = vpop.f32.mrb[0].mxu0
    %1368 = vmatprep.mubr.f32.mxu0 0.0
    %1369 = vmatmul.mubr.f32.gmra.mrb[0].mxu0 %v638
    %v1370 = vpop.f32.mrb[0].mxu0
    %v1371 = vadd.f32 0.0, %v1370
    %v1372 = vpop.f32.mrb[0].mxu0
    %1373 = vdwg.mxu0
    %1375 = vrot.lane.b32.xlu0 %v1275, 112
    %v1376 = vpop.permute.xlu0 %1375
    %1377 = vrot.lane.b32.xlu0 %v1280, 112
    %v1378 = vpop.permute.xlu0 %1377
    %v1380 = vsel %vm456, %v1378, 0
    %1382 = vmatprep.subr.mxu0 0.0
    %1383 = vmatpush1.msra.mxu0 %v1376
    %1384 = vmatprep.subr.mxu0 0.0
    %1385 = vmatpush1.msra.mxu0 %v1380
    %1386 = vmatprep.subr.mxu0 0.0
    %1387 = vmatpush1.msra.mxu0 0.0
    %1388 = vmatprep.subr.mxu0 0.0
    %1389 = vmatpush1.msra.mxu0 0.0
    %1390 = vmatprep.subr.mxu0 0.0
    %1391 = vmatpush1.msra.mxu0 0.0
    %1392 = vmatprep.subr.mxu0 0.0
    %1393 = vmatpush1.msra.mxu0 0.0
    %1394 = vmatprep.subr.mxu0 0.0
    %1395 = vmatpush1.msra.mxu0 0.0
    %1396 = vmatprep.subr.mxu0 0.0
    %1397 = vmatpush1.msra.mxu0 0.0
    %1398 = vmatprep.subr.mxu0 0.0
    %1399 = vmatpush1.msra.mxu0 0.0
    %1400 = vmatprep.subr.mxu0 0.0
    %1401 = vmatpush1.msra.mxu0 0.0
    %1402 = vmatprep.subr.mxu0 0.0
    %1403 = vmatpush1.msra.mxu0 0.0
    %1404 = vmatprep.subr.mxu0 0.0
    %1405 = vmatpush1.msra.mxu0 0.0
    %1406 = vmatprep.subr.mxu0 0.0
    %1407 = vmatpush1.msra.mxu0 0.0
    %1408 = vmatprep.subr.mxu0 0.0
    %1409 = vmatpush1.msra.mxu0 0.0
    %1410 = vmatprep.subr.mxu0 0.0
    %1411 = vmatpush1.msra.mxu0 0.0
    %1412 = vmatprep.subr.mxu0 0.0
    %1413 = vmatpush1.msra.mxu0 0.0
    %1414 = vmatprep.subr.mxu0 0.0
    %1415 = vmatpush1.msra.mxu0 0.0
    %1416 = vmatprep.subr.mxu0 0.0
    %1417 = vmatpush1.msra.mxu0 0.0
    %1418 = vmatprep.subr.mxu0 0.0
    %1419 = vmatpush1.msra.mxu0 0.0
    %1420 = vmatprep.subr.mxu0 0.0
    %1421 = vmatpush1.msra.mxu0 0.0
    %1422 = vmatprep.subr.mxu0 0.0
    %1423 = vmatpush1.msra.mxu0 0.0
    %1424 = vmatprep.subr.mxu0 0.0
    %1425 = vmatpush1.msra.mxu0 0.0
    %1426 = vmatprep.subr.mxu0 0.0
    %1427 = vmatpush1.msra.mxu0 0.0
    %1428 = vmatprep.subr.mxu0 0.0
    %1429 = vmatpush1.msra.mxu0 0.0
    %1430 = vmatprep.subr.mxu0 0.0
    %1431 = vmatpush1.msra.mxu0 0.0
    %1432 = vmatprep.subr.mxu0 0.0
    %1433 = vmatpush1.msra.mxu0 0.0
    %1434 = vmatprep.subr.mxu0 0.0
    %1435 = vmatpush1.msra.mxu0 0.0
    %1436 = vmatprep.subr.mxu0 0.0
    %1437 = vmatpush1.msra.mxu0 0.0
    %1438 = vmatprep.subr.mxu0 0.0
    %1439 = vmatpush1.msra.mxu0 0.0
    %1440 = vmatprep.subr.mxu0 0.0
    %1441 = vmatpush1.msra.mxu0 0.0
    %1442 = vmatprep.subr.mxu0 0.0
    %1443 = vmatpush1.msra.mxu0 0.0
    %1444 = vmatprep.subr.mxu0 0.0
    %1445 = vmatpush1.msra.mxu0 0.0
    %1446 = vmatprep.mubr.f32.mxu0 0.0
    %1447 = vmatmul.mubr.f32.gmra.mrb[0].mxu0 %v735
    %v1448 = vpop.f32.mrb[0].mxu0
    %v1449 = vadd.f32 0.0, %v1448
    %v1450 = vpop.f32.mrb[0].mxu0
    %1451 = vmatprep.mubr.f32.mxu0 0.0
    %1452 = vmatmul.mubr.f32.gmra.mrb[0].mxu0 %v738
    %v1453 = vpop.f32.mrb[0].mxu0
    %v1454 = vadd.f32 0.0, %v1453
    %v1455 = vpop.f32.mrb[0].mxu0
    %1456 = vmatprep.mubr.f32.mxu0 0.0
    %1457 = vmatmul.mubr.f32.gmra.mrb[0].mxu0 %v741
    %v1458 = vpop.f32.mrb[0].mxu0
    %v1459 = vadd.f32 0.0, %v1458
    %v1460 = vpop.f32.mrb[0].mxu0
    %1461 = vmatprep.mubr.f32.mxu0 0.0
    %1462 = vmatmul.mubr.f32.gmra.mrb[0].mxu0 %v744
    %v1463 = vpop.f32.mrb[0].mxu0
    %v1464 = vadd.f32 0.0, %v1463
    %v1465 = vpop.f32.mrb[0].mxu0
    %1466 = vdwg.mxu0
    %v1467 = vadd.f32 %v1356, %v1449
    %v1468 = vadd.f32 %v1361, %v1454
    %v1469 = vadd.f32 %v1366, %v1459
    %v1470 = vadd.f32 %v1371, %v1464
    %1475 = vrot.lane.b32.xlu0 %v428, 112
    %v1476 = vpop.permute.xlu0 %1475
    %1477 = vrot.lane.b32.xlu0 %v433, 112
    %v1478 = vpop.permute.xlu0 %1477
    %1479 = vrot.lane.b32.xlu0 %v438, 112
    %v1480 = vpop.permute.xlu0 %1479
    %1481 = vrot.lane.b32.xlu0 %v443, 112
    %v1482 = vpop.permute.xlu0 %1481
    %v1487 = vadd.f32 %v1467, %v1476
    %v1488 = vadd.f32 %v1468, %v1478
    %v1489 = vadd.f32 %v1469, %v1480
    %v1490 = vadd.f32 %v1470, %v1482
    %vm1491 = vcmp.gt.f32.partialorder %v1487, 0.0
    %vm1492 = vcmp.gt.f32.partialorder %v1488, 0.0
    %vm1493 = vcmp.gt.f32.partialorder %v1489, 0.0
    %vm1494 = vcmp.gt.f32.partialorder %v1490, 0.0
    %v1495 = vmul.f32 %v1487, 0.2
    %v1496 = vmul.f32 %v1488, 0.2
    %v1497 = vmul.f32 %v1489, 0.2
    %v1498 = vmul.f32 %v1490, 0.2
    %v1499 = vsel %vm1491, %v1487, %v1495
    %v1500 = vsel %vm1492, %v1488, %v1496
    %v1501 = vsel %vm1493, %v1489, %v1497
    %v1502 = vsel %vm1494, %v1490, %v1498
    %v1504 = vsel %vm535, %v1499, 0
    %v1507 = vsel %vm535, %v1500, 0
    %v1510 = vsel %vm535, %v1501, 0
    %v1513 = vsel %vm535, %v1502, 0
    %1515 = vmatprep.subr.mxu0 0.0
    %1516 = vmatpush1.msra.mxu0 %v1283
    %1517 = vmatprep.subr.mxu0 0.0
    %1518 = vmatpush1.msra.mxu0 %v1284
    %1519 = vmatprep.subr.mxu0 0.0
    %1520 = vmatpush1.msra.mxu0 0.0
    %1521 = vmatprep.subr.mxu0 0.0
    %1522 = vmatpush1.msra.mxu0 0.0
    %1523 = vmatprep.subr.mxu0 0.0
    %1524 = vmatpush1.msra.mxu0 0.0
    %1525 = vmatprep.subr.mxu0 0.0
    %1526 = vmatpush1.msra.mxu0 0.0
    %1527 = vmatprep.subr.mxu0 0.0
    %1528 = vmatpush1.msra.mxu0 0.0
    %1529 = vmatprep.subr.mxu0 0.0
    %1530 = vmatpush1.msra.mxu0 0.0
    %1531 = vmatprep.subr.mxu0 0.0
    %1532 = vmatpush1.msra.mxu0 0.0
    %1533 = vmatprep.subr.mxu0 0.0
    %1534 = vmatpush1.msra.mxu0 0.0
    %1535 = vmatprep.subr.mxu0 0.0
    %1536 = vmatpush1.msra.mxu0 0.0
    %1537 = vmatprep.subr.mxu0 0.0
    %1538 = vmatpush1.msra.mxu0 0.0
    %1539 = vmatprep.subr.mxu0 0.0
    %1540 = vmatpush1.msra.mxu0 0.0
    %1541 = vmatprep.subr.mxu0 0.0
    %1542 = vmatpush1.msra.mxu0 0.0
    %1543 = vmatprep.subr.mxu0 0.0
    %1544 = vmatpush1.msra.mxu0 0.0
    %1545 = vmatprep.subr.mxu0 0.0
    %1546 = vmatpush1.msra.mxu0 0.0
    %1547 = vmatprep.subr.mxu0 0.0
    %1548 = vmatpush1.msra.mxu0 0.0
    %1549 = vmatprep.subr.mxu0 0.0
    %1550 = vmatpush1.msra.mxu0 0.0
    %1551 = vmatprep.subr.mxu0 0.0
    %1552 = vmatpush1.msra.mxu0 0.0
    %1553 = vmatprep.subr.mxu0 0.0
    %1554 = vmatpush1.msra.mxu0 0.0
    %1555 = vmatprep.subr.mxu0 0.0
    %1556 = vmatpush1.msra.mxu0 0.0
    %1557 = vmatprep.subr.mxu0 0.0
    %1558 = vmatpush1.msra.mxu0 0.0
    %1559 = vmatprep.subr.mxu0 0.0
    %1560 = vmatpush1.msra.mxu0 0.0
    %1561 = vmatprep.subr.mxu0 0.0
    %1562 = vmatpush1.msra.mxu0 0.0
    %1563 = vmatprep.subr.mxu0 0.0
    %1564 = vmatpush1.msra.mxu0 0.0
    %1565 = vmatprep.subr.mxu0 0.0
    %1566 = vmatpush1.msra.mxu0 0.0
    %1567 = vmatprep.subr.mxu0 0.0
    %1568 = vmatpush1.msra.mxu0 0.0
    %1569 = vmatprep.subr.mxu0 0.0
    %1570 = vmatpush1.msra.mxu0 0.0
    %1571 = vmatprep.subr.mxu0 0.0
    %1572 = vmatpush1.msra.mxu0 0.0
    %1573 = vmatprep.subr.mxu0 0.0
    %1574 = vmatpush1.msra.mxu0 0.0
    %1575 = vmatprep.subr.mxu0 0.0
    %1576 = vmatpush1.msra.mxu0 0.0
    %1577 = vmatprep.subr.mxu0 0.0
    %1578 = vmatpush1.msra.mxu0 0.0
    %1579 = vmatprep.mubr.f32.mxu0 0.0
    %1580 = vmatmul.mubr.f32.gmra.mrb[0].mxu0 %v1504
    %v1581 = vpop.f32.mrb[0].mxu0
    %v1582 = vadd.f32 0.0, %v1581
    %v1583 = vpop.f32.mrb[0].mxu0
    %1584 = vmatprep.mubr.f32.mxu0 0.0
    %1585 = vmatmul.mubr.f32.gmra.mrb[0].mxu0 %v1507
    %v1586 = vpop.f32.mrb[0].mxu0
    %v1587 = vadd.f32 0.0, %v1586
    %v1588 = vpop.f32.mrb[0].mxu0
    %1589 = vmatprep.mubr.f32.mxu0 0.0
    %1590 = vmatmul.mubr.f32.gmra.mrb[0].mxu0 %v1510
    %v1591 = vpop.f32.mrb[0].mxu0
    %v1592 = vadd.f32 0.0, %v1591
    %v1593 = vpop.f32.mrb[0].mxu0
    %1594 = vmatprep.mubr.f32.mxu0 0.0
    %1595 = vmatmul.mubr.f32.gmra.mrb[0].mxu0 %v1513
    %v1596 = vpop.f32.mrb[0].mxu0
    %v1597 = vadd.f32 0.0, %v1596
    %v1598 = vpop.f32.mrb[0].mxu0
    %1599 = vdwg.mxu0
    %1601 = vset.pattern.permute.xlu0 0
    %1602 = vperm.xlu0 %1601, %v1582
    %v1603 = vpop.permute.xlu0 %1602
    %1606 = vset.pattern.permute.xlu0 0
    %1607 = vperm.xlu0 %1606, %v1587
    %v1608 = vpop.permute.xlu0 %1607
    %1611 = vset.pattern.permute.xlu0 0
    %1612 = vperm.xlu0 %1611, %v1592
    %v1613 = vpop.permute.xlu0 %1612
    %1616 = vset.pattern.permute.xlu0 0
    %1617 = vperm.xlu0 %1616, %v1597
    %v1618 = vpop.permute.xlu0 %1617
    %v1620 = vsel %vm308, %v1603, -1e+30
    %v1621 = vsel %vm309, %v1608, -1e+30
    %v1622 = vsel %vm310, %v1613, -1e+30
    %v1623 = vsel %vm311, %v1618, -1e+30
    %v1624 = vsel %vm627, %v1620, -inf
    %v1625 = vsel %vm627, %v1621, -inf
    %v1626 = vsel %vm627, %v1622, -inf
    %v1627 = vsel %vm977, %v1623, -inf
    %v1628 = vmax.f32 %v1624, %v1625
    %v1629 = vmax.f32 %v1626, %v1627
    %v1630 = vmax.f32 %v1628, %v1629
    %v1631 = vrot.slane %v1630, 4
    %v1632 = vmax.f32 %v1630, %v1631
    %v1633 = vrot.slane %v1632, 2
    %v1634 = vmax.f32 %v1632, %v1633
    %v1635 = vrot.slane %v1634, 1
    %v1636 = vmax.f32 %v1634, %v1635
    %v1637 = vsub.f32 %v1620, %v1636
    %v1638 = vsub.f32 %v1621, %v1636
    %v1639 = vsub.f32 %v1622, %v1636
    %v1640 = vsub.f32 %v1623, %v1636
    %v1641 = vmul.f32 %v1637, 1.442695
    %v1642 = vpow.pop %v1641
    %v1643 = vmul.f32 %v1638, 1.442695
    %v1644 = vpow.pop %v1643
    %v1645 = vmul.f32 %v1639, 1.442695
    %v1646 = vpow.pop %v1645
    %v1647 = vmul.f32 %v1640, 1.442695
    %v1648 = vpow.pop %v1647
    %v1649 = vsel %vm308, %v1642, 0.0
    %v1650 = vsel %vm309, %v1644, 0.0
    %v1651 = vsel %vm310, %v1646, 0.0
    %v1652 = vsel %vm311, %v1648, 0.0
    %v1653 = vsel %vm627, %v1649, 0.0
    %v1654 = vsel %vm627, %v1650, 0.0
    %v1655 = vadd.f32 %v1653, %v1654
    %v1656 = vsel %vm627, %v1651, 0.0
    %v1657 = vadd.f32 %v1655, %v1656
    %v1658 = vsel %vm977, %v1652, 0.0
    %v1659 = vadd.f32 %v1657, %v1658
    %v1660 = vrot.slane %v1659, 4
    %v1661 = vadd.f32 %v1659, %v1660
    %v1662 = vrot.slane %v1661, 2
    %v1663 = vadd.f32 %v1661, %v1662
    %v1664 = vrot.slane %v1663, 1
    %v1665 = vadd.f32 %v1663, %v1664
    %v1666 = vmul.f32 %v324, %v1636
    %v1667 = vmul.f32 %v325, %v1636
    %v1668 = vmul.f32 %v326, %v1636
    %v1669 = vmul.f32 %v327, %v1636
    %v1670 = vsel %vm627, %v1666, 0.0
    %1671 = vadd.xlane.f32.xlu0 %v1670
    %v1672 = vpop.xlane.xlu0 %1671
    %v1673 = vsel %vm627, %v1667, 0.0
    %1674 = vadd.xlane.f32.xlu0 %v1673
    %v1675 = vpop.xlane.xlu0 %1674
    %v1676 = vsel %vm627, %v1668, 0.0
    %1677 = vadd.xlane.f32.xlu0 %v1676
    %v1678 = vpop.xlane.xlu0 %1677
    %v1679 = vsel %vm977, %v1669, 0.0
    %1680 = vadd.xlane.f32.xlu0 %v1679
    %v1681 = vpop.xlane.xlu0 %1680
    %v1682 = vmul.f32 %v324, %v1665
    %v1683 = vmul.f32 %v325, %v1665
    %v1684 = vmul.f32 %v326, %v1665
    %v1685 = vmul.f32 %v327, %v1665
    %v1686 = vsel %vm627, %v1682, 0.0
    %1687 = vadd.xlane.f32.xlu0 %v1686
    %v1688 = vpop.xlane.xlu0 %1687
    %v1689 = vsel %vm627, %v1683, 0.0
    %1690 = vadd.xlane.f32.xlu0 %v1689
    %v1691 = vpop.xlane.xlu0 %1690
    %v1692 = vsel %vm627, %v1684, 0.0
    %1693 = vadd.xlane.f32.xlu0 %v1692
    %v1694 = vpop.xlane.xlu0 %1693
    %v1695 = vsel %vm977, %v1685, 0.0
    %1696 = vadd.xlane.f32.xlu0 %v1695
    %v1697 = vpop.xlane.xlu0 %1696
    %v1698 = vsub.f32 %v1582, %v1672
    %v1699 = vsub.f32 %v1587, %v1675
    %v1700 = vsub.f32 %v1592, %v1678
    %v1701 = vsub.f32 %v1597, %v1681
    %v1702 = vmul.f32 %v1698, 1.442695
    %v1703 = vpow.pop %v1702
    %v1704 = vmul.f32 %v1699, 1.442695
    %v1705 = vpow.pop %v1704
    %v1706 = vmul.f32 %v1700, 1.442695
    %v1707 = vpow.pop %v1706
    %v1708 = vmul.f32 %v1701, 1.442695
    %v1709 = vpow.pop %v1708
    %v1710 = vrcp.pop %v1688
    %v1711 = vrcp.pop %v1691
    %v1712 = vrcp.pop %v1694
    %v1713 = vrcp.pop %v1697
    %v1714 = vmul.f32 %v1703, %v1710
    %v1715 = vmul.f32 %v1705, %v1711
    %v1716 = vmul.f32 %v1707, %v1712
    %v1717 = vmul.f32 %v1709, %v1713
    %1719 = vset.pattern.permute.xlu0 0
    %1720 = vperm.xlu0 %1719, %v1714
    %v1721 = vpop.permute.xlu0 %1720
    %1724 = vset.pattern.permute.xlu0 0
    %1725 = vperm.xlu0 %1724, %v1715
    %v1726 = vpop.permute.xlu0 %1725
    %1729 = vset.pattern.permute.xlu0 0
    %1730 = vperm.xlu0 %1729, %v1716
    %v1731 = vpop.permute.xlu0 %1730
    %1734 = vset.pattern.permute.xlu0 0
    %1735 = vperm.xlu0 %1734, %v1717
    %v1736 = vpop.permute.xlu0 %1735
    %v1738 = vmul.f32 %v1356, %v1721
    %v1739 = vmul.f32 %v1361, %v1726
    %v1740 = vmul.f32 %v1366, %v1731
    %v1741 = vmul.f32 %v1371, %v1736
    %v1742 = vlaneseq
    %v1743 = vshrl.u32 %v1742, 7
    %v1744 = vsub.s32 0, %v1743
    %v1745 = vrot.slane %v1285, %v1744
    %v1747 = vsel %vm1104, %v1741, 0
    %1749 = vmatprep.subr.mxu0 0.0
    %1750 = vmatpush1.msra.mxu0 %v1738
    %1751 = vmatprep.subr.mxu0 0.0
    %1752 = vmatpush1.msra.mxu0 %v1739
    %1753 = vmatprep.subr.mxu0 0.0
    %1754 = vmatpush1.msra.mxu0 %v1740
    %1755 = vmatprep.subr.mxu0 0.0
    %1756 = vmatpush1.msra.mxu0 %v1747
    %1757 = vmatprep.subr.mxu0 0.0
    %1758 = vmatpush1.msra.mxu0 0.0
    %1759 = vmatprep.subr.mxu0 0.0
    %1760 = vmatpush1.msra.mxu0 0.0
    %1761 = vmatprep.subr.mxu0 0.0
    %1762 = vmatpush1.msra.mxu0 0.0
    %1763 = vmatprep.subr.mxu0 0.0
    %1764 = vmatpush1.msra.mxu0 0.0
    %1765 = vmatprep.subr.mxu0 0.0
    %1766 = vmatpush1.msra.mxu0 0.0
    %1767 = vmatprep.subr.mxu0 0.0
    %1768 = vmatpush1.msra.mxu0 0.0
    %1769 = vmatprep.subr.mxu0 0.0
    %1770 = vmatpush1.msra.mxu0 0.0
    %1771 = vmatprep.subr.mxu0 0.0
    %1772 = vmatpush1.msra.mxu0 0.0
    %1773 = vmatprep.subr.mxu0 0.0
    %1774 = vmatpush1.msra.mxu0 0.0
    %1775 = vmatprep.subr.mxu0 0.0
    %1776 = vmatpush1.msra.mxu0 0.0
    %1777 = vmatprep.subr.mxu0 0.0
    %1778 = vmatpush1.msra.mxu0 0.0
    %1779 = vmatprep.subr.mxu0 0.0
    %1780 = vmatpush1.msra.mxu0 0.0
    %1781 = vmatprep.subr.mxu0 0.0
    %1782 = vmatpush1.msra.mxu0 0.0
    %1783 = vmatprep.subr.mxu0 0.0
    %1784 = vmatpush1.msra.mxu0 0.0
    %1785 = vmatprep.subr.mxu0 0.0
    %1786 = vmatpush1.msra.mxu0 0.0
    %1787 = vmatprep.subr.mxu0 0.0
    %1788 = vmatpush1.msra.mxu0 0.0
    %1789 = vmatprep.subr.mxu0 0.0
    %1790 = vmatpush1.msra.mxu0 0.0
    %1791 = vmatprep.subr.mxu0 0.0
    %1792 = vmatpush1.msra.mxu0 0.0
    %1793 = vmatprep.subr.mxu0 0.0
    %1794 = vmatpush1.msra.mxu0 0.0
    %1795 = vmatprep.subr.mxu0 0.0
    %1796 = vmatpush1.msra.mxu0 0.0
    %1797 = vmatprep.subr.mxu0 0.0
    %1798 = vmatpush1.msra.mxu0 0.0
    %1799 = vmatprep.subr.mxu0 0.0
    %1800 = vmatpush1.msra.mxu0 0.0
    %1801 = vmatprep.subr.mxu0 0.0
    %1802 = vmatpush1.msra.mxu0 0.0
    %1803 = vmatprep.subr.mxu0 0.0
    %1804 = vmatpush1.msra.mxu0 0.0
    %1805 = vmatprep.subr.mxu0 0.0
    %1806 = vmatpush1.msra.mxu0 0.0
    %1807 = vmatprep.subr.mxu0 0.0
    %1808 = vmatpush1.msra.mxu0 0.0
    %1809 = vmatprep.subr.mxu0 0.0
    %1810 = vmatpush1.msra.mxu0 0.0
    %1811 = vmatprep.subr.mxu0 0.0
    %1812 = vmatpush1.msra.mxu0 0.0
    %1813 = vmatprep.mubr.f32.mxu0 0.0
    %1814 = vmatmul.mubr.f32.gmra.mrb[0].mxu0 %v1099
    %v1815 = vpop.f32.mrb[0].mxu0
    %v1816 = vadd.f32 %v1745, %v1815
    %v1817 = vpop.f32.mrb[0].mxu0
    %1818 = vmatprep.mubr.f32.mxu0 0.0
    %1819 = vmatmul.mubr.f32.gmra.mrb[0].mxu0 %v1102
    %v1820 = vpop.f32.mrb[0].mxu0
    %v1821 = vadd.f32 %v1745, %v1820
    %v1822 = vpop.f32.mrb[0].mxu0
    %1823 = vdwg.mxu0
    %v1824 = vld [vmem:[%s7 + $0x90] sm:$0xff]
    %v1825 = vld [vmem:[%s7 + $0x98] sm:$0xff]
    %v1827 = vsel %vm535, %v1816, 0
    %v1830 = vsel %vm535, %v1821, 0
    %1832 = vmatprep.subr.mxu0 0.0
    %1833 = vmatpush1.msra.mxu0 %v1824
    %1834 = vmatprep.subr.mxu0 0.0
    %1835 = vmatpush1.msra.mxu0 %v1825
    %1836 = vmatprep.subr.mxu0 0.0
    %1837 = vmatpush1.msra.mxu0 0.0
    %1838 = vmatprep.subr.mxu0 0.0
    %1839 = vmatpush1.msra.mxu0 0.0
    %1840 = vmatprep.subr.mxu0 0.0
    %1841 = vmatpush1.msra.mxu0 0.0
    %1842 = vmatprep.subr.mxu0 0.0
    %1843 = vmatpush1.msra.mxu0 0.0
    %1844 = vmatprep.subr.mxu0 0.0
    %1845 = vmatpush1.msra.mxu0 0.0
    %1846 = vmatprep.subr.mxu0 0.0
    %1847 = vmatpush1.msra.mxu0 0.0
    %1848 = vmatprep.subr.mxu0 0.0
    %1849 = vmatpush1.msra.mxu0 0.0
    %1850 = vmatprep.subr.mxu0 0.0
    %1851 = vmatpush1.msra.mxu0 0.0
    %1852 = vmatprep.subr.mxu0 0.0
    %1853 = vmatpush1.msra.mxu0 0.0
    %1854 = vmatprep.subr.mxu0 0.0
    %1855 = vmatpush1.msra.mxu0 0.0
    %1856 = vmatprep.subr.mxu0 0.0
    %1857 = vmatpush1.msra.mxu0 0.0
    %1858 = vmatprep.subr.mxu0 0.0
    %1859 = vmatpush1.msra.mxu0 0.0
    %1860 = vmatprep.subr.mxu0 0.0
    %1861 = vmatpush1.msra.mxu0 0.0
    %1862 = vmatprep.subr.mxu0 0.0
    %1863 = vmatpush1.msra.mxu0 0.0
    %1864 = vmatprep.subr.mxu0 0.0
    %1865 = vmatpush1.msra.mxu0 0.0
    %1866 = vmatprep.subr.mxu0 0.0
    %1867 = vmatpush1.msra.mxu0 0.0
    %1868 = vmatprep.subr.mxu0 0.0
    %1869 = vmatpush1.msra.mxu0 0.0
    %1870 = vmatprep.subr.mxu0 0.0
    %1871 = vmatpush1.msra.mxu0 0.0
    %1872 = vmatprep.subr.mxu0 0.0
    %1873 = vmatpush1.msra.mxu0 0.0
    %1874 = vmatprep.subr.mxu0 0.0
    %1875 = vmatpush1.msra.mxu0 0.0
    %1876 = vmatprep.subr.mxu0 0.0
    %1877 = vmatpush1.msra.mxu0 0.0
    %1878 = vmatprep.subr.mxu0 0.0
    %1879 = vmatpush1.msra.mxu0 0.0
    %1880 = vmatprep.subr.mxu0 0.0
    %1881 = vmatpush1.msra.mxu0 0.0
    %1882 = vmatprep.subr.mxu0 0.0
    %1883 = vmatpush1.msra.mxu0 0.0
    %1884 = vmatprep.subr.mxu0 0.0
    %1885 = vmatpush1.msra.mxu0 0.0
    %1886 = vmatprep.subr.mxu0 0.0
    %1887 = vmatpush1.msra.mxu0 0.0
    %1888 = vmatprep.subr.mxu0 0.0
    %1889 = vmatpush1.msra.mxu0 0.0
    %1890 = vmatprep.subr.mxu0 0.0
    %1891 = vmatpush1.msra.mxu0 0.0
    %1892 = vmatprep.subr.mxu0 0.0
    %1893 = vmatpush1.msra.mxu0 0.0
    %1894 = vmatprep.subr.mxu0 0.0
    %1895 = vmatpush1.msra.mxu0 0.0
    %1896 = vmatprep.mubr.f32.mxu0 0.0
    %1897 = vmatmul.mubr.f32.gmra.mrb[0].mxu0 %v1827
    %v1898 = vpop.f32.mrb[0].mxu0
    %v1899 = vadd.f32 0.0, %v1898
    %v1900 = vpop.f32.mrb[0].mxu0
    %1901 = vmatprep.mubr.f32.mxu0 0.0
    %1902 = vmatmul.mubr.f32.gmra.mrb[0].mxu0 %v1830
    %v1903 = vpop.f32.mrb[0].mxu0
    %v1904 = vadd.f32 0.0, %v1903
    %v1905 = vpop.f32.mrb[0].mxu0
    %1906 = vdwg.mxu0
    %1909 = vrot.lane.b32.xlu0 %v1899, 96
    %v1910 = vpop.permute.xlu0 %1909
    %1911 = vrot.lane.b32.xlu0 %v1904, 96
    %v1912 = vpop.permute.xlu0 %1911
    %v1914 = vsel %vm456, %v1912, 0
    %1916 = vmatprep.subr.mxu0 0.0
    %1917 = vmatpush1.msra.mxu0 %v1910
    %1918 = vmatprep.subr.mxu0 0.0
    %1919 = vmatpush1.msra.mxu0 %v1914
    %1920 = vmatprep.subr.mxu0 0.0
    %1921 = vmatpush1.msra.mxu0 0.0
    %1922 = vmatprep.subr.mxu0 0.0
    %1923 = vmatpush1.msra.mxu0 0.0
    %1924 = vmatprep.subr.mxu0 0.0
    %1925 = vmatpush1.msra.mxu0 0.0
    %1926 = vmatprep.subr.mxu0 0.0
    %1927 = vmatpush1.msra.mxu0 0.0
    %1928 = vmatprep.subr.mxu0 0.0
    %1929 = vmatpush1.msra.mxu0 0.0
    %1930 = vmatprep.subr.mxu0 0.0
    %1931 = vmatpush1.msra.mxu0 0.0
    %1932 = vmatprep.subr.mxu0 0.0
    %1933 = vmatpush1.msra.mxu0 0.0
    %1934 = vmatprep.subr.mxu0 0.0
    %1935 = vmatpush1.msra.mxu0 0.0
    %1936 = vmatprep.subr.mxu0 0.0
    %1937 = vmatpush1.msra.mxu0 0.0
    %1938 = vmatprep.subr.mxu0 0.0
    %1939 = vmatpush1.msra.mxu0 0.0
    %1940 = vmatprep.subr.mxu0 0.0
    %1941 = vmatpush1.msra.mxu0 0.0
    %1942 = vmatprep.subr.mxu0 0.0
    %1943 = vmatpush1.msra.mxu0 0.0
    %1944 = vmatprep.subr.mxu0 0.0
    %1945 = vmatpush1.msra.mxu0 0.0
    %1946 = vmatprep.subr.mxu0 0.0
    %1947 = vmatpush1.msra.mxu0 0.0
    %1948 = vmatprep.subr.mxu0 0.0
    %1949 = vmatpush1.msra.mxu0 0.0
    %1950 = vmatprep.subr.mxu0 0.0
    %1951 = vmatpush1.msra.mxu0 0.0
    %1952 = vmatprep.subr.mxu0 0.0
    %1953 = vmatpush1.msra.mxu0 0.0
    %1954 = vmatprep.subr.mxu0 0.0
    %1955 = vmatpush1.msra.mxu0 0.0
    %1956 = vmatprep.subr.mxu0 0.0
    %1957 = vmatpush1.msra.mxu0 0.0
    %1958 = vmatprep.subr.mxu0 0.0
    %1959 = vmatpush1.msra.mxu0 0.0
    %1960 = vmatprep.subr.mxu0 0.0
    %1961 = vmatpush1.msra.mxu0 0.0
    %1962 = vmatprep.subr.mxu0 0.0
    %1963 = vmatpush1.msra.mxu0 0.0
    %1964 = vmatprep.subr.mxu0 0.0
    %1965 = vmatpush1.msra.mxu0 0.0
    %1966 = vmatprep.subr.mxu0 0.0
    %1967 = vmatpush1.msra.mxu0 0.0
    %1968 = vmatprep.subr.mxu0 0.0
    %1969 = vmatpush1.msra.mxu0 0.0
    %1970 = vmatprep.subr.mxu0 0.0
    %1971 = vmatpush1.msra.mxu0 0.0
    %1972 = vmatprep.subr.mxu0 0.0
    %1973 = vmatpush1.msra.mxu0 0.0
    %1974 = vmatprep.subr.mxu0 0.0
    %1975 = vmatpush1.msra.mxu0 0.0
    %1976 = vmatprep.subr.mxu0 0.0
    %1977 = vmatpush1.msra.mxu0 0.0
    %1978 = vmatprep.subr.mxu0 0.0
    %1979 = vmatpush1.msra.mxu0 0.0
    %1980 = vmatprep.mubr.f32.mxu0 0.0
    %1981 = vmatmul.mubr.f32.gmra.mrb[0].mxu0 %v735
    %v1982 = vpop.f32.mrb[0].mxu0
    %v1983 = vadd.f32 0.0, %v1982
    %v1984 = vpop.f32.mrb[0].mxu0
    %1985 = vmatprep.mubr.f32.mxu0 0.0
    %1986 = vmatmul.mubr.f32.gmra.mrb[0].mxu0 %v738
    %v1987 = vpop.f32.mrb[0].mxu0
    %v1988 = vadd.f32 0.0, %v1987
    %v1989 = vpop.f32.mrb[0].mxu0
    %1990 = vmatprep.mubr.f32.mxu0 0.0
    %1991 = vmatmul.mubr.f32.gmra.mrb[0].mxu0 %v741
    %v1992 = vpop.f32.mrb[0].mxu0
    %v1993 = vadd.f32 0.0, %v1992
    %v1994 = vpop.f32.mrb[0].mxu0
    %1995 = vdwg.mxu0
    %v1996 = vsel %vm456, %v1904, 0
    %1998 = vmatprep.subr.mxu0 0.0
    %1999 = vmatpush1.msra.mxu0 %v1899
    %2000 = vmatprep.subr.mxu0 0.0
    %2001 = vmatpush1.msra.mxu0 %v1996
    %2002 = vmatprep.subr.mxu0 0.0
    %2003 = vmatpush1.msra.mxu0 0.0
    %2004 = vmatprep.subr.mxu0 0.0
    %2005 = vmatpush1.msra.mxu0 0.0
    %2006 = vmatprep.subr.mxu0 0.0
    %2007 = vmatpush1.msra.mxu0 0.0
    %2008 = vmatprep.subr.mxu0 0.0
    %2009 = vmatpush1.msra.mxu0 0.0
    %2010 = vmatprep.subr.mxu0 0.0
    %2011 = vmatpush1.msra.mxu0 0.0
    %2012 = vmatprep.subr.mxu0 0.0
    %2013 = vmatpush1.msra.mxu0 0.0
    %2014 = vmatprep.subr.mxu0 0.0
    %2015 = vmatpush1.msra.mxu0 0.0
    %2016 = vmatprep.subr.mxu0 0.0
    %2017 = vmatpush1.msra.mxu0 0.0
    %2018 = vmatprep.subr.mxu0 0.0
    %2019 = vmatpush1.msra.mxu0 0.0
    %2020 = vmatprep.subr.mxu0 0.0
    %2021 = vmatpush1.msra.mxu0 0.0
    %2022 = vmatprep.subr.mxu0 0.0
    %2023 = vmatpush1.msra.mxu0 0.0
    %2024 = vmatprep.subr.mxu0 0.0
    %2025 = vmatpush1.msra.mxu0 0.0
    %2026 = vmatprep.subr.mxu0 0.0
    %2027 = vmatpush1.msra.mxu0 0.0
    %2028 = vmatprep.subr.mxu0 0.0
    %2029 = vmatpush1.msra.mxu0 0.0
    %2030 = vmatprep.subr.mxu0 0.0
    %2031 = vmatpush1.msra.mxu0 0.0
    %2032 = vmatprep.subr.mxu0 0.0
    %2033 = vmatpush1.msra.mxu0 0.0
    %2034 = vmatprep.subr.mxu0 0.0
    %2035 = vmatpush1.msra.mxu0 0.0
    %2036 = vmatprep.subr.mxu0 0.0
    %2037 = vmatpush1.msra.mxu0 0.0
    %2038 = vmatprep.subr.mxu0 0.0
    %2039 = vmatpush1.msra.mxu0 0.0
    %2040 = vmatprep.subr.mxu0 0.0
    %2041 = vmatpush1.msra.mxu0 0.0
    %2042 = vmatprep.subr.mxu0 0.0
    %2043 = vmatpush1.msra.mxu0 0.0
    %2044 = vmatprep.subr.mxu0 0.0
    %2045 = vmatpush1.msra.mxu0 0.0
    %2046 = vmatprep.subr.mxu0 0.0
    %2047 = vmatpush1.msra.mxu0 0.0
    %2048 = vmatprep.subr.mxu0 0.0
    %2049 = vmatpush1.msra.mxu0 0.0
    %2050 = vmatprep.subr.mxu0 0.0
    %2051 = vmatpush1.msra.mxu0 0.0
    %2052 = vmatprep.subr.mxu0 0.0
    %2053 = vmatpush1.msra.mxu0 0.0
    %2054 = vmatprep.subr.mxu0 0.0
    %2055 = vmatpush1.msra.mxu0 0.0
    %2056 = vmatprep.subr.mxu0 0.0
    %2057 = vmatpush1.msra.mxu0 0.0
    %2058 = vmatprep.subr.mxu0 0.0
    %2059 = vmatpush1.msra.mxu0 0.0
    %2060 = vmatprep.subr.mxu0 0.0
    %2061 = vmatpush1.msra.mxu0 0.0
    %2062 = vmatprep.mubr.f32.mxu0 0.0
    %2063 = vmatmul.mubr.f32.gmra.mrb[0].mxu0 %v629
    %v2064 = vpop.f32.mrb[0].mxu0
    %v2065 = vadd.f32 %v1983, %v2064
    %v2066 = vpop.f32.mrb[0].mxu0
    %2067 = vmatprep.mubr.f32.mxu0 0.0
    %2068 = vmatmul.mubr.f32.gmra.mrb[0].mxu0 %v632
    %v2069 = vpop.f32.mrb[0].mxu0
    %v2070 = vadd.f32 %v1988, %v2069
    %v2071 = vpop.f32.mrb[0].mxu0
    %2072 = vmatprep.mubr.f32.mxu0 0.0
    %2073 = vmatmul.mubr.f32.gmra.mrb[0].mxu0 %v635
    %v2074 = vpop.f32.mrb[0].mxu0
    %v2075 = vadd.f32 %v1993, %v2074
    %v2076 = vpop.f32.mrb[0].mxu0
    %2077 = vdwg.mxu0
    %2078 = vrot.lane.b32.xlu0 %v428, 96
    %v2079 = vpop.permute.xlu0 %2078
    %2080 = vrot.lane.b32.xlu0 %v433, 96
    %v2081 = vpop.permute.xlu0 %2080
    %2082 = vrot.lane.b32.xlu0 %v438, 96
    %v2083 = vpop.permute.xlu0 %2082
    %v2087 = vadd.f32 %v2065, %v2079
    %v2088 = vadd.f32 %v2070, %v2081
    %v2089 = vadd.f32 %v2075, %v2083
    %v2090 = vld [vmem:[%s8 + $0x7] sm:$0x1]
    %v2091 = vlaneseq
    %v2092 = vshrl.u32 %v2091, 7
    %v2093 = vsub.s32 0, %v2092
    %v2094 = vrot.slane %v2090, %v2093
    %v2095 = vadd.f32 %v2087, %v2094
    %v2096 = vadd.f32 %v2088, %v2094
    %v2097 = vadd.f32 %v2089, %v2094
    %vm2098 = vcmp.gt.f32.partialorder %v2095, 0.0
    %vm2099 = vcmp.gt.f32.partialorder %v2096, 0.0
    %vm2100 = vcmp.gt.f32.partialorder %v2097, 0.0
    %v2101 = vmin.f32 %v2095, 0.0
    %v2102 = vmin.f32 %v2096, 0.0
    %v2103 = vmin.f32 %v2097, 0.0
    %v2104 = vmul.f32 %v2101, 1.442695
    %v2105 = vpow.pop %v2104
    %v2106 = vmul.f32 %v2102, 1.442695
    %v2107 = vpow.pop %v2106
    %v2108 = vmul.f32 %v2103, 1.442695
    %v2109 = vpow.pop %v2108
    %v2110 = vsub.f32 %v2105, 1.0
    %v2111 = vsub.f32 %v2107, 1.0
    %v2112 = vsub.f32 %v2109, 1.0
    %v2113 = vsel %vm2098, %v2095, %v2110
    %v2114 = vsel %vm2099, %v2096, %v2111
    %v2115 = vsel %vm2100, %v2097, %v2112
    %v2116 = vld [vmem:[%s7 + $0xa0] sm:$0x1]
    %v2117 = vld [vmem:[%s8 + $0x8] sm:$0x1]
    %2119 = vset.pattern.permute.xlu0 0
    %2120 = vperm.xlu0 %2119, %v2117
    %v2121 = vpop.permute.xlu0 %2120
    %vm2123 = vcmask 261120
    %v2125 = vsel %vm2123, %v2116, 0
    %v2128 = vsel %vm2123, %v2113, 0
    %v2131 = vsel %vm2123, %v2114, 0
    %v2134 = vsel %vm2123, %v2115, 0
    %2136 = vmatprep.subr.mxu0 0.0
    %2137 = vmatpush1.xpose.msra.mxu0 %v2128
    %2138 = vmatprep.subr.mxu0 0.0
    %2139 = vmatpush1.xpose.msra.mxu0 %v2131
    %2140 = vmatprep.subr.mxu0 0.0
    %2141 = vmatpush1.xpose.msra.mxu0 %v2134
    %2142 = vmatprep.subr.mxu0 0.0
    %2143 = vmatpush1.xpose.msra.mxu0 0.0
    %2144 = vmatprep.subr.mxu0 0.0
    %2145 = vmatpush1.xpose.msra.mxu0 0.0
    %2146 = vmatprep.subr.mxu0 0.0
    %2147 = vmatpush1.xpose.msra.mxu0 0.0
    %2148 = vmatprep.subr.mxu0 0.0
    %2149 = vmatpush1.xpose.msra.mxu0 0.0
    %2150 = vmatprep.subr.mxu0 0.0
    %2151 = vmatpush1.xpose.msra.mxu0 0.0
    %2152 = vmatprep.subr.mxu0 0.0
    %2153 = vmatpush1.xpose.msra.mxu0 0.0
    %2154 = vmatprep.subr.mxu0 0.0
    %2155 = vmatpush1.xpose.msra.mxu0 0.0
    %2156 = vmatprep.subr.mxu0 0.0
    %2157 = vmatpush1.xpose.msra.mxu0 0.0
    %2158 = vmatprep.subr.mxu0 0.0
    %2159 = vmatpush1.xpose.msra.mxu0 0.0
    %2160 = vmatprep.subr.mxu0 0.0
    %2161 = vmatpush1.xpose.msra.mxu0 0.0
    %2162 = vmatprep.subr.mxu0 0.0
    %2163 = vmatpush1.xpose.msra.mxu0 0.0
    %2164 = vmatprep.subr.mxu0 0.0
    %2165 = vmatpush1.xpose.msra.mxu0 0.0
    %2166 = vmatprep.subr.mxu0 0.0
    %2167 = vmatpush1.xpose.msra.mxu0 0.0
    %2168 = vmatprep.subr.mxu0 0.0
    %2169 = vmatpush1.xpose.msra.mxu0 0.0
    %2170 = vmatprep.subr.mxu0 0.0
    %2171 = vmatpush1.xpose.msra.mxu0 0.0
    %2172 = vmatprep.subr.mxu0 0.0
    %2173 = vmatpush1.xpose.msra.mxu0 0.0
    %2174 = vmatprep.subr.mxu0 0.0
    %2175 = vmatpush1.xpose.msra.mxu0 0.0
    %2176 = vmatprep.subr.mxu0 0.0
    %2177 = vmatpush1.xpose.msra.mxu0 0.0
    %2178 = vmatprep.subr.mxu0 0.0
    %2179 = vmatpush1.xpose.msra.mxu0 0.0
    %2180 = vmatprep.subr.mxu0 0.0
    %2181 = vmatpush1.xpose.msra.mxu0 0.0
    %2182 = vmatprep.subr.mxu0 0.0
    %2183 = vmatpush1.xpose.msra.mxu0 0.0
    %2184 = vmatprep.subr.mxu0 0.0
    %2185 = vmatpush1.xpose.msra.mxu0 0.0
    %2186 = vmatprep.subr.mxu0 0.0
    %2187 = vmatpush1.xpose.msra.mxu0 0.0
    %2188 = vmatprep.subr.mxu0 0.0
    %2189 = vmatpush1.xpose.msra.mxu0 0.0
    %2190 = vmatprep.subr.mxu0 0.0
    %2191 = vmatpush1.xpose.msra.mxu0 0.0
    %2192 = vmatprep.subr.mxu0 0.0
    %2193 = vmatpush1.xpose.msra.mxu0 0.0
    %2194 = vmatprep.subr.mxu0 0.0
    %2195 = vmatpush1.xpose.msra.mxu0 0.0
    %2196 = vmatprep.subr.mxu0 0.0
    %2197 = vmatpush1.xpose.msra.mxu0 0.0
    %2198 = vmatprep.subr.mxu0 0.0
    %2199 = vmatpush1.xpose.msra.mxu0 0.0
    %2200 = vmatprep.mubr.f32.mxu0 0.0
    %2201 = vmatmul.mubr.f32.gmra.mrb[0].mxu0 %v2125
    %v2202 = vpop.f32.mrb[0].mxu0
    %v2203 = vadd.f32 %v2121, %v2202
    %v2204 = vpop.f32.mrb[0].mxu0
    %2205 = vdwg.mxu0
    %vm2206 = vcmask 155648
    %2207 = vst.msk [vmem:[#allocation2] sm:$0x1] %vm2206, %v2203
    // Predicated region
    $region38: #{dual_cnn_gatv2_forward.1} parent=1 // pred_check
      _
    $region39: #{dual_cnn_gatv2_forward.1} parent=1 // pred_check_branch
      %2209 = sbr.rel (0) target = $region41
    $region40: #{dual_cnn_gatv2_forward.1} parent=1 // pred_region
      %s2211 = ssub.s32 16, 16
      %2212 = vsyncadd [#allocation3], %s2211
      %s2214 = sshll.u32 [#allocation2], 4
      %s2215 = int_to_ptr.vmem [resolvable:$true] %s2214
      %2217 = dma.vmem_to_hbm [thread:$0]  %s2215, 16, %s9, [#allocation3]
    $region41: #{dual_cnn_gatv2_forward.1} parent=1 // pred_fallthru
      _
    // Predicated region
    $region42: #{dual_cnn_gatv2_forward.1} parent=1 // pred_check
      _
    $region43: #{dual_cnn_gatv2_forward.1} parent=1 // pred_check_branch
      %2219 = sbr.rel (0) target = $region45
    $region44: #{dual_cnn_gatv2_forward.1} parent=1 // pred_region
      %2220 = dma.done [#allocation3], 16
    $region45: #{dual_cnn_gatv2_forward.1} parent=1 // pred_fallthru
      _
    %2221 = vsyncpa [#allocation3], 1

</llo_original>
